<compile_context>
chip_gen: v5e
topology: v5e:2x2
jax: 0.10.0
libtpu: 0.0.40
codegen_flags: <defaults>
</compile_context>

<pallas_src>
import functools

import numpy as np

import jax
import jax.numpy as jnp
from jax import lax
from jax.experimental import pallas as pl
from jax.experimental.pallas import tpu as pltpu

GRID_SIZE = 8
C_MID = 256
C_OUT = GRID_SIZE * GRID_SIZE + 1      # 65 logits channels
C_OUT_PAD = 128                        # lane-aligned padded logits width
BN_EPS = 1e-3                          # matches torch.nn.BatchNorm2d(eps=0.001)
NEG_INF = -1e30


def _round_up(x, m):
    return ((x + m - 1) // m) * m


def _make_kernel(tile_rows, w_al, tile_pix):
    """Kernel closure over static tiling constants."""

    def kernel(x3_ref, wA_ref, bA_ref, wB_ref, bB_ref, logits_ref, prob_ref):
        # x3_ref:   ((H_pad+2)*w_al, 3*Cin) bf16 — whole padded image, resident
        # wA_ref:   (3, 3*Cin, 256) bf16      — convPa weights, one slab per row tap
        # bA_ref:   (1, 256) f32               — convPa bias
        # wB_ref:   (256, 128) bf16            — convPb (bnPa+bnPb folded, padded)
        # bB_ref:   (1, 128) f32               — convPb bias; pad lanes hold -1e30
        # logits_ref: (tile_pix, 128) f32 ; prob_ref: (tile_pix, 128) bf16
        row0 = pl.program_id(1) * tile_rows

        # convPa (3x3) = 3 accumulating MXU matmuls over row taps, K = 3*Cin.
        acc = None
        for kh in range(3):
            start = pl.multiple_of((row0 + kh) * w_al, 8)
            xt = x3_ref[pl.ds(start, tile_pix), :]            # (tile_pix, 3*Cin)
            part = jnp.dot(xt, wA_ref[kh], preferred_element_type=jnp.float32)
            acc = part if acc is None else acc + part

        a = jnp.maximum(acc + bA_ref[...], 0.0)               # bias + ReLU (f32)

        # convPb (1x1) with bnPa/bnPb folded; softmax mask baked into bias.
        logits = jnp.dot(a.astype(jnp.bfloat16), wB_ref[...],
                         preferred_element_type=jnp.float32) + bB_ref[...]

        # channel softmax; padded lanes already at -1e30 -> no explicit mask.
        m = jnp.max(logits, axis=-1, keepdims=True)
        e = jnp.exp(logits - m)
        inv = pl.reciprocal(jnp.sum(e, axis=-1, keepdims=True), approx=True)

        logits_ref[...] = logits                              # lane-dense f32
        prob_ref[...] = (e * inv).astype(prob_ref.dtype)      # lane-dense bf16

    return kernel


def detector_head_forward(x_nchw, params, *, tile_rows=None, target_tile_pix=2048):
    N, Cin, H, W = x_nchw.shape
    r = GRID_SIZE
    K3 = 3 * Cin

    # ---- tiling: rows per tile; tile_pix = rows * W_al (multiple of 8) -----
    W_al = _round_up(W, 8)
    if tile_rows is None:
        tr = max(8, ((target_tile_pix // W_al) // 8) * 8)
    else:
        tr = max(8, (tile_rows // 8) * 8)
    tr = min(tr, _round_up(H, 8))
    H_pad = _round_up(H, tr)

    tile_pix = tr * W_al
    out_pix = H_pad * W_al
    npix_in = (H_pad + 2) * W_al

    # ---- glue: NHWC, bf16 FIRST, halo pad, width-only (3x) im2col ----------
    x = jnp.transpose(x_nchw, (0, 2, 3, 1)).astype(jnp.bfloat16)      # NHWC bf16
    xpad = jnp.pad(x, ((0, 0), (1, 1 + H_pad - H), (1, 1), (0, 0)))   # halo + row pad
    x3 = jnp.concatenate([xpad[:, :, kw:kw + W, :] for kw in range(3)], axis=-1)
    if W_al != W:
        x3 = jnp.pad(x3, ((0, 0), (0, 0), (0, W_al - W), (0, 0)))
    x3 = x3.reshape(N, npix_in, K3)                                   # flat pixel raster

    # ---- glue: parameter packing / eval-mode BN folding ---------------------
    # convPa weight: torch (256, Cin, 3, 3) -> (kh, kw, Cin, 256) -> (3, 3*Cin, 256)
    wA = jnp.transpose(params["convPa_w"], (2, 3, 1, 0)).reshape(3, K3, C_MID)
    wA = wA.astype(jnp.bfloat16)
    bA = params["convPa_b"].reshape(1, C_MID).astype(jnp.float32)

    sA = params["bnPa_gamma"] / jnp.sqrt(params["bnPa_var"] + BN_EPS)
    tA = params["bnPa_beta"] - params["bnPa_mean"] * sA

    # convPb weight: torch (65, 256, 1, 1) -> (256, 65); fold bnPb then bnPa.
    wB = params["convPb_w"][:, :, 0, 0].T
    sB = params["bnPb_gamma"] / jnp.sqrt(params["bnPb_var"] + BN_EPS)
    tB = params["bnPb_beta"] - params["bnPb_mean"] * sB
    wB_f = wB * sB[None, :]
    bB_f = params["convPb_b"] * sB + tB
    wB2 = sA[:, None] * wB_f                                          # (256, 65)
    bB2 = bB_f + tA @ wB_f                                            # (65,)

    wB_pad = jnp.zeros((C_MID, C_OUT_PAD), jnp.float32).at[:, :C_OUT].set(wB2)
    wB_pad = wB_pad.astype(jnp.bfloat16)
    bB_pad = jnp.full((1, C_OUT_PAD), NEG_INF, jnp.float32).at[0, :C_OUT].set(bB2)

    kernel = _make_kernel(tr, W_al, tile_pix)
    grid = (N, H_pad // tr)

    logits_pad, prob_pad = pl.pallas_call(
        kernel,
        out_shape=(
            jax.ShapeDtypeStruct((N, out_pix, C_OUT_PAD), jnp.float32),
            jax.ShapeDtypeStruct((N, out_pix, C_OUT_PAD), jnp.bfloat16),
        ),
        grid_spec=pltpu.PrefetchScalarGridSpec(
            num_scalar_prefetch=0,
            grid=grid,
            in_specs=[
                # whole padded image, resident per batch (index only uses b)
                pl.BlockSpec((None, npix_in, K3), lambda b, h: (b, 0, 0)),
                pl.BlockSpec((3, K3, C_MID), lambda b, h: (0, 0, 0)),
                pl.BlockSpec((1, C_MID), lambda b, h: (0, 0)),
                pl.BlockSpec((C_MID, C_OUT_PAD), lambda b, h: (0, 0)),
                pl.BlockSpec((1, C_OUT_PAD), lambda b, h: (0, 0)),
            ],
            out_specs=(
                pl.BlockSpec((None, tile_pix, C_OUT_PAD), lambda b, h: (b, h, 0)),
                pl.BlockSpec((None, tile_pix, C_OUT_PAD), lambda b, h: (b, h, 0)),
            ),
        ),
        compiler_params=pltpu.CompilerParams(
            dimension_semantics=("parallel", "parallel"),
            vmem_limit_bytes=64 << 20,
        ),
    )(x3, wA, bA, wB_pad, bB_pad)

    # ---- glue: un-pad, back to NCHW logits, pixel_shuffle the prob ----------
    logits = logits_pad.reshape(N, H_pad, W_al, C_OUT_PAD)[:, :H, :W, :C_OUT]
    logits = jnp.transpose(logits, (0, 3, 1, 2))                      # (N,65,H,W)

    prob = prob_pad.reshape(N, H_pad, W_al, C_OUT_PAD)[:, :H, :W, :r * r]
    prob = prob.astype(jnp.float32).reshape(N, H, W, r, r)            # c = i*r + j
    prob = jnp.transpose(prob, (0, 1, 3, 2, 4)).reshape(N, H * r, W * r)
    return {"logits": logits, "prob": prob}


# ---------------------- pure-JAX reference (for checking) -------------------
def detector_head_ref(x_nchw, params):
    def bn(y, g, b, m, v):
        return (y - m[None, :, None, None]) / jnp.sqrt(v + BN_EPS)[None, :, None, None] \
               * g[None, :, None, None] + b[None, :, None, None]

    dn = ("NCHW", "OIHW", "NCHW")
    y = lax.conv_general_dilated(x_nchw, params["convPa_w"], (1, 1),
                                 ((1, 1), (1, 1)), dimension_numbers=dn)
    y = y + params["convPa_b"][None, :, None, None]
    y = jnp.maximum(y, 0.0)
    y = bn(y, params["bnPa_gamma"], params["bnPa_beta"],
           params["bnPa_mean"], params["bnPa_var"])
    z = lax.conv_general_dilated(y, params["convPb_w"], (1, 1),
                                 ((0, 0), (0, 0)), dimension_numbers=dn)
    z = z + params["convPb_b"][None, :, None, None]
    z = bn(z, params["bnPb_gamma"], params["bnPb_beta"],
           params["bnPb_mean"], params["bnPb_var"])
    prob = jax.nn.softmax(z, axis=1)[:, :-1, :, :]
    N, _, H, W = prob.shape
    r = GRID_SIZE
    prob = prob.reshape(N, 1, r, r, H, W)
    prob = jnp.transpose(prob, (0, 1, 4, 2, 5, 3)).reshape(N, H * r, W * r)
    return {"logits": z, "prob": prob}


def init_params(key, input_channel):
    ks = jax.random.split(key, 12)
    p = {
        "convPa_w": 0.1 * jax.random.normal(ks[0], (C_MID, input_channel, 3, 3), jnp.float32),
        "convPa_b": 0.1 * jax.random.normal(ks[1], (C_MID,), jnp.float32),
        "bnPa_gamma": 1.0 + 0.1 * jax.random.normal(ks[2], (C_MID,), jnp.float32),
        "bnPa_beta": 0.1 * jax.random.normal(ks[3], (C_MID,), jnp.float32),
        "bnPa_mean": 0.05 * jax.random.normal(ks[4], (C_MID,), jnp.float32),
        "bnPa_var": 0.5 + jax.random.uniform(ks[5], (C_MID,), jnp.float32),
        "convPb_w": 0.1 * jax.random.normal(ks[6], (C_OUT, C_MID, 1, 1), jnp.float32),
        "convPb_b": 0.1 * jax.random.normal(ks[7], (C_OUT,), jnp.float32),
        "bnPb_gamma": 1.0 + 0.1 * jax.random.normal(ks[8], (C_OUT,), jnp.float32),
        "bnPb_beta": 0.1 * jax.random.normal(ks[9], (C_OUT,), jnp.float32),
        "bnPb_mean": 0.05 * jax.random.normal(ks[10], (C_OUT,), jnp.float32),
        "bnPb_var": 0.5 + jax.random.uniform(ks[11], (C_OUT,), jnp.float32),
    }
    return p


if __name__ == "__main__":
    key = jax.random.PRNGKey(0)
    kx, kp = jax.random.split(key)

    N, Cin, H, W = 2, 4, 16, 16
    x = jax.random.normal(kx, (N, Cin, H, W), jnp.float32)
    params = init_params(kp, Cin)

    # tile_rows=8 -> two row-tiles per image, exercising the resident-block
    # reuse and the in-kernel row-tap slicing across grid steps.
    fwd = jax.jit(functools.partial(detector_head_forward, tile_rows=8))
    out = fwd(x, params)
    jax.block_until_ready(out)

    ref = detector_head_ref(x, params)
    assert out["logits"].shape == (N, C_OUT, H, W)
    assert out["prob"].shape == (N, H * GRID_SIZE, W * GRID_SIZE)
    # bf16 matmul operands + approx reciprocal + bf16 prob store -> loose tol
    np.testing.assert_allclose(np.asarray(out["logits"]), np.asarray(ref["logits"]),
                               rtol=5e-2, atol=5e-2)
    np.testing.assert_allclose(np.asarray(out["prob"]), np.asarray(ref["prob"]),
                               rtol=5e-2, atol=5e-2)

    print("KERNEL_OK")
</pallas_src>

<mosaic_0001>
module attributes {stable_mosaic.version = 11 : i64} {
  func.func @kernel(%arg0: i32, %arg1: i32, %arg2: memref<1x288x12xbf16, #tpu.memory_space<vmem>>, %arg3: memref<3x12x256xbf16, #tpu.memory_space<vmem>>, %arg4: memref<1x256xf32, #tpu.memory_space<vmem>>, %arg5: memref<256x128xbf16, #tpu.memory_space<vmem>>, %arg6: memref<1x128xf32, #tpu.memory_space<vmem>>, %arg7: memref<1x128x128xf32, #tpu.memory_space<vmem>>, %arg8: memref<1x128x128xbf16, #tpu.memory_space<vmem>>) attributes {dimension_semantics = [#tpu.dimension_semantics<parallel>, #tpu.dimension_semantics<parallel>], iteration_bounds = array<i64: 2, 2>, scalar_prefetch = 0 : i64, scratch_operands = 0 : i64, tpu.core_type = #tpu.core_type<tc>, window_params = [{transform_indices = @transform_0, window_bounds = array<i64: 1, 288, 12>}, {pipeline_mode = #tpu.pipeline_mode<synchronous>, transform_indices = @transform_1, window_bounds = array<i64: 3, 12, 256>}, {pipeline_mode = #tpu.pipeline_mode<synchronous>, transform_indices = @transform_2, window_bounds = array<i64: 1, 256>}, {pipeline_mode = #tpu.pipeline_mode<synchronous>, transform_indices = @transform_3, window_bounds = array<i64: 256, 128>}, {pipeline_mode = #tpu.pipeline_mode<synchronous>, transform_indices = @transform_4, window_bounds = array<i64: 1, 128>}, {transform_indices = @transform_5, window_bounds = array<i64: 1, 128, 128>}, {transform_indices = @transform_6, window_bounds = array<i64: 1, 128, 128>}]} {
    %c8_i32 = arith.constant 8 : i32
    %0 = arith.muli %arg1, %c8_i32 : i32
    %c0_i32 = arith.constant 0 : i32
    %1 = arith.addi %0, %c0_i32 : i32
    %c16_i32 = arith.constant 16 : i32
    %2 = arith.muli %1, %c16_i32 : i32
    %3 = tpu.assume_multiple %2, 8 : i32
    %c0 = arith.constant 0 : index
    %4 = arith.index_cast %3 : i32 to index
    %c0_0 = arith.constant 0 : index
    %5 = vector.load %arg2[%c0, %4, %c0_0] : memref<1x288x12xbf16, #tpu.memory_space<vmem>>, vector<1x128x12xbf16>
    %6 = vector.shape_cast %5 : vector<1x128x12xbf16> to vector<128x12xbf16>
    %c0_1 = arith.constant 0 : index
    %c0_2 = arith.constant 0 : index
    %c0_3 = arith.constant 0 : index
    %7 = vector.load %arg3[%c0_1, %c0_2, %c0_3] : memref<3x12x256xbf16, #tpu.memory_space<vmem>>, vector<1x12x256xbf16>
    %8 = vector.shape_cast %7 : vector<1x12x256xbf16> to vector<12x256xbf16>
    %cst = arith.constant dense<0.000000e+00> : vector<128x256xf32>
    %9 = tpu.matmul %6, %8, %cst {dimension_numbers = #tpu.dot_dimension_numbers<[1], [0], [0], [1], [0, 0, 1, 1], [], []>} : vector<128x12xbf16>, vector<12x256xbf16>, vector<128x256xf32> -> vector<128x256xf32>
    %c1_i32 = arith.constant 1 : i32
    %10 = arith.addi %0, %c1_i32 : i32
    %c16_i32_4 = arith.constant 16 : i32
    %11 = arith.muli %10, %c16_i32_4 : i32
    %12 = tpu.assume_multiple %11, 8 : i32
    %c0_5 = arith.constant 0 : index
    %13 = arith.index_cast %12 : i32 to index
    %c0_6 = arith.constant 0 : index
    %14 = vector.load %arg2[%c0_5, %13, %c0_6] : memref<1x288x12xbf16, #tpu.memory_space<vmem>>, vector<1x128x12xbf16>
    %15 = vector.shape_cast %14 : vector<1x128x12xbf16> to vector<128x12xbf16>
    %c1 = arith.constant 1 : index
    %c0_7 = arith.constant 0 : index
    %c0_8 = arith.constant 0 : index
    %16 = vector.load %arg3[%c1, %c0_7, %c0_8] : memref<3x12x256xbf16, #tpu.memory_space<vmem>>, vector<1x12x256xbf16>
    %17 = vector.shape_cast %16 : vector<1x12x256xbf16> to vector<12x256xbf16>
    %cst_9 = arith.constant dense<0.000000e+00> : vector<128x256xf32>
    %18 = tpu.matmul %15, %17, %cst_9 {dimension_numbers = #tpu.dot_dimension_numbers<[1], [0], [0], [1], [0, 0, 1, 1], [], []>} : vector<128x12xbf16>, vector<12x256xbf16>, vector<128x256xf32> -> vector<128x256xf32>
    %19 = arith.addf %9, %18 : vector<128x256xf32>
    %c2_i32 = arith.constant 2 : i32
    %20 = arith.addi %0, %c2_i32 : i32
    %c16_i32_10 = arith.constant 16 : i32
    %21 = arith.muli %20, %c16_i32_10 : i32
    %22 = tpu.assume_multiple %21, 8 : i32
    %c0_11 = arith.constant 0 : index
    %23 = arith.index_cast %22 : i32 to index
    %c0_12 = arith.constant 0 : index
    %24 = vector.load %arg2[%c0_11, %23, %c0_12] : memref<1x288x12xbf16, #tpu.memory_space<vmem>>, vector<1x128x12xbf16>
    %25 = vector.shape_cast %24 : vector<1x128x12xbf16> to vector<128x12xbf16>
    %c2 = arith.constant 2 : index
    %c0_13 = arith.constant 0 : index
    %c0_14 = arith.constant 0 : index
    %26 = vector.load %arg3[%c2, %c0_13, %c0_14] : memref<3x12x256xbf16, #tpu.memory_space<vmem>>, vector<1x12x256xbf16>
    %27 = vector.shape_cast %26 : vector<1x12x256xbf16> to vector<12x256xbf16>
    %cst_15 = arith.constant dense<0.000000e+00> : vector<128x256xf32>
    %28 = tpu.matmul %25, %27, %cst_15 {dimension_numbers = #tpu.dot_dimension_numbers<[1], [0], [0], [1], [0, 0, 1, 1], [], []>} : vector<128x12xbf16>, vector<12x256xbf16>, vector<128x256xf32> -> vector<128x256xf32>
    %29 = arith.addf %19, %28 : vector<128x256xf32>
    %c0_16 = arith.constant 0 : index
    %c0_17 = arith.constant 0 : index
    %30 = vector.load %arg4[%c0_16, %c0_17] : memref<1x256xf32, #tpu.memory_space<vmem>>, vector<1x256xf32>
    %31 = vector.broadcast %30 : vector<1x256xf32> to vector<128x256xf32>
    %32 = arith.addf %29, %31 : vector<128x256xf32>
    %cst_18 = arith.constant 0.000000e+00 : f32
    %33 = vector.broadcast %cst_18 : f32 to vector<128x256xf32>
    %34 = arith.maximumf %32, %33 : vector<128x256xf32>
    %35 = arith.truncf %34 : vector<128x256xf32> to vector<128x256xbf16>
    %c0_19 = arith.constant 0 : index
    %c0_20 = arith.constant 0 : index
    %36 = vector.load %arg5[%c0_19, %c0_20] : memref<256x128xbf16, #tpu.memory_space<vmem>>, vector<256x128xbf16>
    %cst_21 = arith.constant dense<0.000000e+00> : vector<128x128xf32>
    %37 = tpu.matmul %35, %36, %cst_21 {dimension_numbers = #tpu.dot_dimension_numbers<[1], [0], [0], [1], [0, 0, 1, 1], [], []>} : vector<128x256xbf16>, vector<256x128xbf16>, vector<128x128xf32> -> vector<128x128xf32>
    %c0_22 = arith.constant 0 : index
    %c0_23 = arith.constant 0 : index
    %38 = vector.load %arg6[%c0_22, %c0_23] : memref<1x128xf32, #tpu.memory_space<vmem>>, vector<1x128xf32>
    %39 = vector.broadcast %38 : vector<1x128xf32> to vector<128x128xf32>
    %40 = arith.addf %37, %39 : vector<128x128xf32>
    %cst_24 = arith.constant dense<0xFF800000> : vector<128xf32>
    %41 = vector.multi_reduction <maximumf>, %40, %cst_24 [1] : vector<128x128xf32> to vector<128xf32>
    %42 = vector.shape_cast %41 : vector<128xf32> to vector<128x1xf32>
    %43 = vector.broadcast %42 : vector<128x1xf32> to vector<128x128xf32>
    %44 = arith.subf %40, %43 : vector<128x128xf32>
    %45 = math.exp %44 : vector<128x128xf32>
    %cst_25 = arith.constant dense<0.000000e+00> : vector<128xf32>
    %46 = vector.multi_reduction <add>, %45, %cst_25 [1] : vector<128x128xf32> to vector<128xf32>
    %47 = vector.shape_cast %46 : vector<128xf32> to vector<128x1xf32>
    %48 = tpu.reciprocal %47 {approx = true} : vector<128x1xf32> -> vector<128x1xf32>
    %c0_26 = arith.constant 0 : index
    %c0_27 = arith.constant 0 : index
    %c0_28 = arith.constant 0 : index
    %49 = vector.load %arg7[%c0_26, %c0_27, %c0_28] : memref<1x128x128xf32, #tpu.memory_space<vmem>>, vector<1x128x128xf32>
    %50 = vector.shape_cast %49 : vector<1x128x128xf32> to vector<128x128xf32>
    %51 = vector.shape_cast %40 : vector<128x128xf32> to vector<1x128x128xf32>
    tpu.vector_store %arg7[%c0_26, %c0_27, %c0_28], %51 {strides = array<i32>} : memref<1x128x128xf32, #tpu.memory_space<vmem>>, vector<1x128x128xf32>,
    %52 = vector.broadcast %48 : vector<128x1xf32> to vector<128x128xf32>
    %53 = arith.mulf %45, %52 : vector<128x128xf32>
    %54 = arith.truncf %53 : vector<128x128xf32> to vector<128x128xbf16>
    %c0_29 = arith.constant 0 : index
    %c0_30 = arith.constant 0 : index
    %c0_31 = arith.constant 0 : index
    %55 = vector.load %arg8[%c0_29, %c0_30, %c0_31] : memref<1x128x128xbf16, #tpu.memory_space<vmem>>, vector<1x128x128xbf16>
    %56 = vector.shape_cast %55 : vector<1x128x128xbf16> to vector<128x128xbf16>
    %57 = vector.shape_cast %54 : vector<128x128xbf16> to vector<1x128x128xbf16>
    tpu.vector_store %arg8[%c0_29, %c0_30, %c0_31], %57 {strides = array<i32>} : memref<1x128x128xbf16, #tpu.memory_space<vmem>>, vector<1x128x128xbf16>,
    return
  }
  func.func @transform_0(%arg0: i32, %arg1: i32) -> (i32, i32, i32) {
    %c0_i32 = arith.constant 0 : i32
    %c0_i32_0 = arith.constant 0 : i32
    %c0_i32_1 = arith.constant 0 : i32
    return %arg0, %c0_i32, %c0_i32_0 : i32, i32, i32
  }
  func.func @transform_1(%arg0: i32, %arg1: i32) -> (i32, i32, i32) {
    %c0_i32 = arith.constant 0 : i32
    %c0_i32_0 = arith.constant 0 : i32
    %c0_i32_1 = arith.constant 0 : i32
    %c0_i32_2 = arith.constant 0 : i32
    return %c0_i32, %c0_i32_0, %c0_i32_1 : i32, i32, i32
  }
  func.func @transform_2(%arg0: i32, %arg1: i32) -> (i32, i32) {
    %c0_i32 = arith.constant 0 : i32
    %c0_i32_0 = arith.constant 0 : i32
    %c0_i32_1 = arith.constant 0 : i32
    return %c0_i32, %c0_i32_0 : i32, i32
  }
  func.func @transform_3(%arg0: i32, %arg1: i32) -> (i32, i32) {
    %c0_i32 = arith.constant 0 : i32
    %c0_i32_0 = arith.constant 0 : i32
    %c0_i32_1 = arith.constant 0 : i32
    return %c0_i32, %c0_i32_0 : i32, i32
  }
  func.func @transform_4(%arg0: i32, %arg1: i32) -> (i32, i32) {
    %c0_i32 = arith.constant 0 : i32
    %c0_i32_0 = arith.constant 0 : i32
    %c0_i32_1 = arith.constant 0 : i32
    return %c0_i32, %c0_i32_0 : i32, i32
  }
  func.func @transform_5(%arg0: i32, %arg1: i32) -> (i32, i32, i32) {
    %c0_i32 = arith.constant 0 : i32
    %c0_i32_0 = arith.constant 0 : i32
    return %arg0, %arg1, %c0_i32 : i32, i32, i32
  }
  func.func @transform_6(%arg0: i32, %arg1: i32) -> (i32, i32, i32) {
    %c0_i32 = arith.constant 0 : i32
    %c0_i32_0 = arith.constant 0 : i32
    return %arg0, %arg1, %c0_i32 : i32, i32, i32
  }
}

</mosaic_0001>

<llo_original>
// kernel: detector_head_forward.1
$region0: #{detector_head_forward.1}
  #allocation0 [shape = 'u32[]', space=smem, size = 0x4, offset = 0x4, fixed_abs, tag = 'smem constant byte address 0x4 - core index']
  #allocation1 [shape = 'u32[72,128]{1,0:T(1,128)}', space=vmem, size = 0x9000, scoped, tag = 'internal scratch']
  %s0 = inlined_call_operand.vmem [shape: bf16[2,288,12], index: 0, kind: input, shape index: {}]
  %s1 = inlined_call_operand.vmem [shape: bf16[3,12,256], index: 1, kind: input, shape index: {}]
  %s2 = inlined_call_operand.hbm [shape: f32[1,256], index: 2, kind: input, shape index: {}]
  %s3 = inlined_call_operand.vmem [shape: bf16[256,128], index: 3, kind: input, shape index: {}]
  %s4 = inlined_call_operand.vmem [shape: f32[1,128], index: 4, kind: input, shape index: {}]
  %s5 = inlined_call_operand.vmem [shape: f32[2,256,128], index: 5, kind: output, shape index: {0}]
  %s6 = inlined_call_operand.vmem [shape: bf16[2,256,128], index: 6, kind: output, shape index: {1}]
  %7 = xla_tuple %s5, %s6
  %s8 = sld [smem:[#allocation0]]
  $region65: #{detector_head_forward.1} parent=0
    _
  %s10 = ssub.s32 1, %s8
  %s11 = scalar_select 0, %s10, %s8
  $region1: #{detector_head_forward.1} parent=0
    #allocation2 [shape = 'u8[1024]{0}', space=vmem, size = 0x400, scoped, tag = 'input window, operand 2, single buffered']
    #allocation3 [shape = 's32[2]{0}', space=sflag, size = 0x8, scoped, tag = 'scoped memory for detector_head_forward.1']
    %12 = vsyncpa [#allocation3], 0
    loop: start=0, step=1, limit=6
    $region2: #{detector_head_forward.1} parent=1 // loop_pre_header
      _
    $region3: #{detector_head_forward.1} parent=1 // loop_header
      %s14 = sphi 0, %s18
      %p15 = scmp.ge.s32.totalorder %s14, 6
      %s21 = sphi 0, %s33
      %s22 = sphi 0, %s29
      %s23 = sphi 0, %s21
      %s24 = sphi 0, %s22
      %s25 = sphi 0, %s23
      %s26 = sphi 0, %s24
      %s36 = sphi 0, %s38
      %s39 = sphi 0, %s36
      %s40 = sphi 0, %s39
      %s56 = sphi 0, %s40
      %s60 = sphi 0, %s60
      %s62 = sphi 0, %s60
      %s63 = sphi 0, %s62
      %s77 = sphi 0, %s63
      %s81 = sphi 0, %s81
      %s83 = sphi 0, %s81
      %s84 = sphi 0, %s83
      %s98 = sphi 0, %s84
      %s102 = sphi 0, %s102
      %s104 = sphi 0, %s102
      %s105 = sphi 0, %s104
      %s119 = sphi 0, %s105
      %s123 = sphi 0, %s123
      %s125 = sphi 0, %s123
      %s126 = sphi 0, %s125
      %s140 = sphi 0, %s126
      %s148 = sphi 0, %s150
      %s151 = sphi 0, %s148
      %s152 = sphi 0, %s151
      %s168 = sphi 0, %s152
      %s176 = sphi 0, %s178
      %s179 = sphi 0, %s176
      %s180 = sphi 0, %s179
      %s196 = sphi 0, %s180
    $region4: #{detector_head_forward.1} parent=1 // loop_header_branch
      %17 = sbr.rel (%p15) target = $region8
    $region5: #{detector_head_forward.1} parent=1 // loop_body
      %s19 = ssub.s32 %s14, 1
      %s20 = ssub.s32 %s14, 2
      %s27 = sadd.s32 1, %s22
      %p28 = scmp.ge.s32.totalorder %s27, 2
      %s29 = scalar_select %p28, 0, %s27
      %s30 = sadd.s32 1, %s21
      %s31 = scalar_select %p28, %s30, %s21
      %p32 = scmp.ge.s32.totalorder %s31, 2
      %s33 = scalar_select %p32, 0, %s31
      %s34 = ssub.s32 %s21, %s33
      %p35 = scmp.eq.s32.totalorder %s34, 0
      %s37 = sadd.s32 %s36, 1
      %s38 = scalar_select %p35, %s36, %s37
      %p41 = pneg %p35
      %p42 = scmp.eq.s32.totalorder %s14, 3
      %p43 = por %p41, %p42
      %p44 = scmp.ne.s32.totalorder %s36, %s39
      %p45 = scmp.eq.s32.totalorder %s14, 0
      %p46 = por %p44, %p45
      %p47 = scmp.ne.s32.totalorder %s36, %s39
      %p48 = scmp.eq.s32.totalorder %s19, 3
      %p49 = por %p47, %p48
      %p50 = scmp.ne.s32.totalorder %s39, %s40
      %p51 = scmp.eq.s32.totalorder %s19, 0
      %p52 = por %p50, %p51
      %p53 = scmp.ne.s32.totalorder %s39, %s40
      %p54 = scmp.eq.s32.totalorder %s20, 3
      %p55 = por %p53, %p54
      %p57 = scmp.ne.s32.totalorder %s40, %s56
      %p58 = scmp.eq.s32.totalorder %s20, 0
      %p59 = por %p57, %p58
      %s61 = sadd.s32 %s60, 1
      %p64 = scmp.eq.s32.totalorder %s14, 3
      %p65 = scmp.ne.s32.totalorder %s60, %s62
      %p66 = scmp.eq.s32.totalorder %s14, 0
      %p67 = por %p65, %p66
      %p68 = scmp.ne.s32.totalorder %s60, %s62
      %p69 = scmp.eq.s32.totalorder %s19, 3
      %p70 = por %p68, %p69
      %p71 = scmp.ne.s32.totalorder %s62, %s63
      %p72 = scmp.eq.s32.totalorder %s19, 0
      %p73 = por %p71, %p72
      %p74 = scmp.ne.s32.totalorder %s62, %s63
      %p75 = scmp.eq.s32.totalorder %s20, 3
      %p76 = por %p74, %p75
      %p78 = scmp.ne.s32.totalorder %s63, %s77
      %p79 = scmp.eq.s32.totalorder %s20, 0
      %p80 = por %p78, %p79
      %s82 = sadd.s32 %s81, 1
      %p85 = scmp.eq.s32.totalorder %s14, 3
      %p86 = scmp.ne.s32.totalorder %s81, %s83
      %p87 = scmp.eq.s32.totalorder %s14, 0
      %p88 = por %p86, %p87
      %p89 = scmp.ne.s32.totalorder %s81, %s83
      %p90 = scmp.eq.s32.totalorder %s19, 3
      %p91 = por %p89, %p90
      %p92 = scmp.ne.s32.totalorder %s83, %s84
      %p93 = scmp.eq.s32.totalorder %s19, 0
      %p94 = por %p92, %p93
      %p95 = scmp.ne.s32.totalorder %s83, %s84
      %p96 = scmp.eq.s32.totalorder %s20, 3
      %p97 = por %p95, %p96
      %p99 = scmp.ne.s32.totalorder %s84, %s98
      %p100 = scmp.eq.s32.totalorder %s20, 0
      %p101 = por %p99, %p100
      %s103 = sadd.s32 %s102, 1
      %p106 = scmp.eq.s32.totalorder %s14, 3
      %p107 = scmp.ne.s32.totalorder %s102, %s104
      %p108 = scmp.eq.s32.totalorder %s14, 0
      %p109 = por %p107, %p108
      %p110 = scmp.ne.s32.totalorder %s102, %s104
      %p111 = scmp.eq.s32.totalorder %s19, 3
      %p112 = por %p110, %p111
      %p113 = scmp.ne.s32.totalorder %s104, %s105
      %p114 = scmp.eq.s32.totalorder %s19, 0
      %p115 = por %p113, %p114
      %p116 = scmp.ne.s32.totalorder %s104, %s105
      %p117 = scmp.eq.s32.totalorder %s20, 3
      %p118 = por %p116, %p117
      %p120 = scmp.ne.s32.totalorder %s105, %s119
      %p121 = scmp.eq.s32.totalorder %s20, 0
      %p122 = por %p120, %p121
      %s124 = sadd.s32 %s123, 1
      %p127 = scmp.eq.s32.totalorder %s14, 3
      %p128 = scmp.ne.s32.totalorder %s123, %s125
      %p129 = scmp.eq.s32.totalorder %s14, 0
      %p130 = por %p128, %p129
      %p131 = scmp.ne.s32.totalorder %s123, %s125
      %p132 = scmp.eq.s32.totalorder %s19, 3
      %p133 = por %p131, %p132
      %p134 = scmp.ne.s32.totalorder %s125, %s126
      %p135 = scmp.eq.s32.totalorder %s19, 0
      %p136 = por %p134, %p135
      %p137 = scmp.ne.s32.totalorder %s125, %s126
      %p138 = scmp.eq.s32.totalorder %s20, 3
      %p139 = por %p137, %p138
      %p141 = scmp.ne.s32.totalorder %s126, %s140
      %p142 = scmp.eq.s32.totalorder %s20, 0
      %p143 = por %p141, %p142
      %s144 = ssub.s32 %s21, %s33
      %s145 = ssub.s32 %s22, %s29
      %s146 = sor.u32 %s144, %s145
      %p147 = scmp.eq.s32.totalorder %s146, 0
      %s149 = sadd.s32 %s148, 1
      %s150 = scalar_select %p147, %s148, %s149
      %p153 = pneg %p147
      %p154 = scmp.eq.s32.totalorder %s14, 3
      %p155 = por %p153, %p154
      %p156 = scmp.ne.s32.totalorder %s148, %s151
      %p157 = scmp.eq.s32.totalorder %s14, 0
      %p158 = por %p156, %p157
      %p159 = scmp.ne.s32.totalorder %s148, %s151
      %p160 = scmp.eq.s32.totalorder %s19, 3
      %p161 = por %p159, %p160
      %p162 = scmp.ne.s32.totalorder %s151, %s152
      %p163 = scmp.eq.s32.totalorder %s19, 0
      %p164 = por %p162, %p163
      %p165 = scmp.ne.s32.totalorder %s151, %s152
      %p166 = scmp.eq.s32.totalorder %s20, 3
      %p167 = por %p165, %p166
      %p169 = scmp.ne.s32.totalorder %s152, %s168
      %p170 = scmp.eq.s32.totalorder %s20, 0
      %p171 = por %p169, %p170
      %s172 = ssub.s32 %s21, %s33
      %s173 = ssub.s32 %s22, %s29
      %s174 = sor.u32 %s172, %s173
      %p175 = scmp.eq.s32.totalorder %s174, 0
      %s177 = sadd.s32 %s176, 1
      %s178 = scalar_select %p175, %s176, %s177
      %p181 = pneg %p175
      %p182 = scmp.eq.s32.totalorder %s14, 3
      %p183 = por %p181, %p182
      %p184 = scmp.ne.s32.totalorder %s176, %s179
      %p185 = scmp.eq.s32.totalorder %s14, 0
      %p186 = por %p184, %p185
      %p187 = scmp.ne.s32.totalorder %s176, %s179
      %p188 = scmp.eq.s32.totalorder %s19, 3
      %p189 = por %p187, %p188
      %p190 = scmp.ne.s32.totalorder %s179, %s180
      %p191 = scmp.eq.s32.totalorder %s19, 0
      %p192 = por %p190, %p191
      %p193 = scmp.ne.s32.totalorder %s179, %s180
      %p194 = scmp.eq.s32.totalorder %s20, 3
      %p195 = por %p193, %p194
      %p197 = scmp.ne.s32.totalorder %s180, %s196
      %p198 = scmp.eq.s32.totalorder %s20, 0
      %p199 = por %p197, %p198
      %p200 = scmp.le.s32.totalorder 1, %s14
      %p201 = scmp.lt.s32.totalorder %s14, 5
      %p202 = pnand %p200, %p201
      %p203 = pneg %p202
      // Predicated region
      $region9: #{detector_head_forward.1} parent=5 // pred_check
        _
      $region10: #{detector_head_forward.1} parent=5 // pred_check_branch
        %205 = sbr.rel (%p202) target = $region12
      $region11: #{detector_head_forward.1} parent=5 // pred_region
        %s206 = ssub.s32 %s14, 1
        // Predicated region
        $region13: #{detector_head_forward.1} parent=11 // pred_check
          %p207 = pneg %p73
        $region14: #{detector_head_forward.1} parent=11 // pred_check_branch
          %209 = sbr.rel (%p207) target = $region16
        $region15: #{detector_head_forward.1} parent=11 // pred_region
          _
        $region16: #{detector_head_forward.1} parent=11 // pred_fallthru
          _
        // Predicated region
        $region17: #{detector_head_forward.1} parent=11 // pred_check
          %p210 = pneg %p94
        $region18: #{detector_head_forward.1} parent=11 // pred_check_branch
          %212 = sbr.rel (%p210) target = $region20
        $region19: #{detector_head_forward.1} parent=11 // pred_region
          %214 = vsyncadd [#allocation3], 0
          %s216 = sshll.u32 %s2, 4
          %s217 = int_to_ptr.hbm [resolvable:$true] %s216
          %s218 = sshll.u32 [#allocation2], 4
          %s219 = int_to_ptr.vmem [resolvable:$true] %s218
          %221 = dma.hbm_to_vmem [thread:$0]  %s217, 32, %s219, [#allocation3]
        $region20: #{detector_head_forward.1} parent=11 // pred_fallthru
          _
        // Predicated region
        $region21: #{detector_head_forward.1} parent=11 // pred_check
          %p222 = pneg %p115
        $region22: #{detector_head_forward.1} parent=11 // pred_check_branch
          %224 = sbr.rel (%p222) target = $region24
        $region23: #{detector_head_forward.1} parent=11 // pred_region
          _
        $region24: #{detector_head_forward.1} parent=11 // pred_fallthru
          _
        // Predicated region
        $region25: #{detector_head_forward.1} parent=11 // pred_check
          %p225 = pneg %p136
        $region26: #{detector_head_forward.1} parent=11 // pred_check_branch
          %227 = sbr.rel (%p225) target = $region28
        $region27: #{detector_head_forward.1} parent=11 // pred_region
          _
        $region28: #{detector_head_forward.1} parent=11 // pred_fallthru
          _
      $region12: #{detector_head_forward.1} parent=5 // pred_fallthru
        _
      %p228 = scmp.lt.s32.totalorder %s14, 4
      // Predicated region
      $region29: #{detector_head_forward.1} parent=5 // pred_check
        %p229 = pneg %p228
      $region30: #{detector_head_forward.1} parent=5 // pred_check_branch
        %231 = sbr.rel (%p229) target = $region32
      $region31: #{detector_head_forward.1} parent=5 // pred_region
        // Predicated region
        $region33: #{detector_head_forward.1} parent=31 // pred_check
          %p232 = pneg %p46
        $region34: #{detector_head_forward.1} parent=31 // pred_check_branch
          %234 = sbr.rel (%p232) target = $region36
        $region35: #{detector_head_forward.1} parent=31 // pred_region
          %p235 = scmp.lt.s32.totalorder %s21, 1
          %s236 = scalar_select %p235, %s21, 1
          %s237 = smul.addr %s236, 36
          %s238 = smul.addr %s237, 4
          %s239 = scalar_lea.vmem %s0, %s238
        $region36: #{detector_head_forward.1} parent=31 // pred_fallthru
          _
      $region32: #{detector_head_forward.1} parent=5 // pred_fallthru
        _
      %p240 = scmp.le.s32.totalorder 1, %s14
      %p241 = scmp.lt.s32.totalorder %s14, 5
      %p242 = pnand %p240, %p241
      %p243 = pneg %p242
      // Predicated region
      $region37: #{detector_head_forward.1} parent=5 // pred_check
        _
      $region38: #{detector_head_forward.1} parent=5 // pred_check_branch
        %245 = sbr.rel (%p242) target = $region40
      $region39: #{detector_head_forward.1} parent=5 // pred_region
        %s246 = ssub.s32 %s14, 1
        // Predicated region
        $region41: #{detector_head_forward.1} parent=39 // pred_check
          %p247 = pneg %p94
        $region42: #{detector_head_forward.1} parent=39 // pred_check_branch
          %249 = sbr.rel (%p247) target = $region44
        $region43: #{detector_head_forward.1} parent=39 // pred_region
          %251 = dma.done [#allocation3], 32
        $region44: #{detector_head_forward.1} parent=39 // pred_fallthru
          _
        %p252 = scmp.lt.s32.totalorder %s23, 1
        %s253 = scalar_select %p252, %s23, 1
        %s254 = smul.addr %s253, 36
        %s255 = smul.addr %s254, 4
        %s256 = scalar_lea.vmem %s0, %s255
        %p257 = pneg %p52
        %p258 = pneg %p49
        %p259 = pneg %p73
        %p260 = pneg %p70
        %p261 = pneg %p94
        %p262 = pneg %p91
        %p263 = pneg %p115
        %p264 = pneg %p112
        %p265 = pneg %p136
        %p266 = pneg %p133
        %p267 = pneg %p164
        %p268 = pneg %p161
        %s269 = smul.u32 16, %s24
        %p270 = scmp.lt.s32.totalorder %s23, 1
        %s271 = scalar_select %p270, %s23, 1
        %p272 = scmp.lt.s32.totalorder %s269, 31
        %s273 = scalar_select %p272, %s269, 31
        %s274 = smul.addr %s271, 32
        %s275 = sadd.s32 %s273, %s274
        %s276 = smul.addr %s275, 8
        %s277 = scalar_lea.vmem %s5, %s276
        %p278 = pneg %p192
        %p279 = pneg %p189
        %s280 = smul.u32 16, %s24
        %p281 = scmp.lt.s32.totalorder %s23, 1
        %s282 = scalar_select %p281, %s23, 1
        %p283 = scmp.lt.s32.totalorder %s280, 31
        %s284 = scalar_select %p283, %s280, 31
        %s285 = smul.addr %s282, 32
        %s286 = sadd.s32 %s284, %s285
        %s287 = smul.addr %s286, 4
        %s288 = scalar_lea.vmem %s6, %s287
        %p289 = scmp.lt.s32.totalorder %s23, 1
        %s290 = scalar_select %p289, %s23, 1
        %s291 = smul.addr %s290, 36
        %s292 = smul.addr %s291, 4
        %s293 = scalar_lea.vmem %s0, %s292
        %s294 = smul.u32 16, %s24
        %p295 = scmp.lt.s32.totalorder %s23, 1
        %s296 = scalar_select %p295, %s23, 1
        %p297 = scmp.lt.s32.totalorder %s294, 31
        %s298 = scalar_select %p297, %s294, 31
        %s299 = smul.addr %s296, 32
        %s300 = sadd.s32 %s298, %s299
        %s301 = smul.addr %s300, 8
        %s302 = scalar_lea.vmem %s5, %s301
        %s303 = smul.u32 16, %s24
        %s304 = smul.u32 16, %s24
        %p305 = scmp.lt.s32.totalorder %s23, 1
        %s306 = scalar_select %p305, %s23, 1
        %p307 = scmp.lt.s32.totalorder %s304, 31
        %s308 = scalar_select %p307, %s304, 31
        %s309 = smul.addr %s306, 32
        %s310 = sadd.s32 %s308, %s309
        %s311 = smul.addr %s310, 4
        %s312 = scalar_lea.vmem %s6, %s311
        %s313 = smul.u32 16, %s24
        %s315 = smul.u32 %s24, 8
        %s316 = smul.u32 %s24, 128
        %s317 = sshra.s32 %s316, 3
        %s318 = sand.u32 %s316, 7
        %s319 = smul.addr %s317, 4
        %s320 = scalar_lea.vmem %s293, %s319
        %v321 = vld [vmem:[%s320] sm:$0xf]
        %v322 = vld [vmem:[%s320 + $0x4] sm:$0xf]
        %v323 = vld [vmem:[%s320 + $0x8] sm:$0xf]
        %v324 = vld [vmem:[%s320 + $0xc] sm:$0xf]
        %v325 = vld [vmem:[%s320 + $0x10] sm:$0xf]
        %v326 = vld [vmem:[%s320 + $0x14] sm:$0xf]
        %v327 = vld [vmem:[%s320 + $0x18] sm:$0xf]
        %v328 = vld [vmem:[%s320 + $0x1c] sm:$0xf]
        %v329 = vld [vmem:[%s320 + $0x20] sm:$0xf]
        %v330 = vld [vmem:[%s320 + $0x24] sm:$0xf]
        %v331 = vld [vmem:[%s320 + $0x28] sm:$0xf]
        %v332 = vld [vmem:[%s320 + $0x2c] sm:$0xf]
        %v333 = vld [vmem:[%s320 + $0x30] sm:$0xf]
        %v334 = vld [vmem:[%s320 + $0x34] sm:$0xf]
        %v335 = vld [vmem:[%s320 + $0x38] sm:$0xf]
        %v336 = vld [vmem:[%s320 + $0x3c] sm:$0xf]
        %v337 = vld [vmem:[%s1] sm:$0xff]
        %v338 = vld [vmem:[%s1 + $0x8] sm:$0x33]
        %s339 = sadd.s32 %s315, 1
        %s340 = smul.u32 %s339, 16
        %s341 = sshra.s32 %s340, 3
        %s342 = sand.u32 %s340, 7
        %s343 = smul.addr %s341, 4
        %s344 = scalar_lea.vmem %s293, %s343
        %v345 = vld [vmem:[%s344] sm:$0xf]
        %v346 = vld [vmem:[%s344 + $0x4] sm:$0xf]
        %v347 = vld [vmem:[%s344 + $0x8] sm:$0xf]
        %v348 = vld [vmem:[%s344 + $0xc] sm:$0xf]
        %v349 = vld [vmem:[%s344 + $0x10] sm:$0xf]
        %v350 = vld [vmem:[%s344 + $0x14] sm:$0xf]
        %v351 = vld [vmem:[%s344 + $0x18] sm:$0xf]
        %v352 = vld [vmem:[%s344 + $0x1c] sm:$0xf]
        %v353 = vld [vmem:[%s344 + $0x20] sm:$0xf]
        %v354 = vld [vmem:[%s344 + $0x24] sm:$0xf]
        %v355 = vld [vmem:[%s344 + $0x28] sm:$0xf]
        %v356 = vld [vmem:[%s344 + $0x2c] sm:$0xf]
        %v357 = vld [vmem:[%s344 + $0x30] sm:$0xf]
        %v358 = vld [vmem:[%s344 + $0x34] sm:$0xf]
        %v359 = vld [vmem:[%s344 + $0x38] sm:$0xf]
        %v360 = vld [vmem:[%s344 + $0x3c] sm:$0xf]
        %s361 = scalar_lea.vmem %s1, 16
        %v362 = vld [vmem:[%s361] sm:$0xff]
        %v363 = vld [vmem:[%s361 + $0x8] sm:$0x33]
        %v380 = vunpack.c.l.b16 %v345
        %v381 = vunpack.c.l.b16 %v346
        %v382 = vunpack.c.l.b16 %v347
        %v383 = vunpack.c.l.b16 %v348
        %v384 = vunpack.c.l.b16 %v349
        %v385 = vunpack.c.l.b16 %v350
        %v386 = vunpack.c.l.b16 %v351
        %v387 = vunpack.c.l.b16 %v352
        %v388 = vunpack.c.l.b16 %v353
        %v389 = vunpack.c.l.b16 %v354
        %v390 = vunpack.c.l.b16 %v355
        %v391 = vunpack.c.l.b16 %v356
        %v392 = vunpack.c.l.b16 %v357
        %v393 = vunpack.c.l.b16 %v358
        %v394 = vunpack.c.l.b16 %v359
        %v395 = vunpack.c.l.b16 %v360
        %v396 = vpack.c.b16 %v381, %v380
        %v397 = vpack.c.b16 %v383, %v382
        %v398 = vpack.c.b16 %v385, %v384
        %v399 = vpack.c.b16 %v387, %v386
        %v400 = vpack.c.b16 %v389, %v388
        %v401 = vpack.c.b16 %v391, %v390
        %v402 = vpack.c.b16 %v393, %v392
        %v403 = vpack.c.b16 %v395, %v394
        %v406 = vunpack.c.l.b16 %v362
        %v407 = vunpack.c.h.b16 %v362
        %v408 = vunpack.c.l.b16 %v363
        %v409 = vunpack.c.h.b16 %v363
        %v410 = vpack.c.b16 %v408, %v406
        %v411 = vpack.c.b16 %v409, %v407
        %vm412 = vcmask 97280
        %v414 = vsel %vm412, %v396, 0
        %v417 = vsel %vm412, %v397, 0
        %v420 = vsel %vm412, %v398, 0
        %v423 = vsel %vm412, %v399, 0
        %v426 = vsel %vm412, %v400, 0
        %v429 = vsel %vm412, %v401, 0
        %v432 = vsel %vm412, %v402, 0
        %v435 = vsel %vm412, %v403, 0
        %vm437 = vcmask 1045504
        %v439 = vsel %vm437, %v410, 0
        %v442 = vsel %vm437, %v411, 0
        %444 = vmatpush.bf16.msra.mxu0 0
        %445 = vmatpush.bf16.msra.mxu0 0
        %446 = vmatpush.bf16.msra.mxu0 0
        %447 = vmatpush.bf16.msra.mxu0 0
        %448 = vmatpush.bf16.msra.mxu0 0
        %449 = vmatpush.bf16.msra.mxu0 0
        %450 = vmatpush.bf16.msra.mxu0 0
        %451 = vmatpush.bf16.msra.mxu0 %v439
        %452 = vmatmul.bf16.gmra.mxu0 %v414
        %v453 = vpop.f32.mrf.mxu0
        %v454 = vadd.f32 0.0, %v453
        %v455 = vpop.f32.mrf.mxu0
        %v456 = vadd.f32 0.0, %v455
        %457 = vmatmul.bf16.gmra.mxu0 %v417
        %v458 = vpop.f32.mrf.mxu0
        %v459 = vadd.f32 0.0, %v458
        %v460 = vpop.f32.mrf.mxu0
        %v461 = vadd.f32 0.0, %v460
        %462 = vmatmul.bf16.gmra.mxu0 %v420
        %v463 = vpop.f32.mrf.mxu0
        %v464 = vadd.f32 0.0, %v463
        %v465 = vpop.f32.mrf.mxu0
        %v466 = vadd.f32 0.0, %v465
        %467 = vmatmul.bf16.gmra.mxu0 %v423
        %v468 = vpop.f32.mrf.mxu0
        %v469 = vadd.f32 0.0, %v468
        %v470 = vpop.f32.mrf.mxu0
        %v471 = vadd.f32 0.0, %v470
        %472 = vmatmul.bf16.gmra.mxu0 %v426
        %v473 = vpop.f32.mrf.mxu0
        %v474 = vadd.f32 0.0, %v473
        %v475 = vpop.f32.mrf.mxu0
        %v476 = vadd.f32 0.0, %v475
        %477 = vmatmul.bf16.gmra.mxu0 %v429
        %v478 = vpop.f32.mrf.mxu0
        %v479 = vadd.f32 0.0, %v478
        %v480 = vpop.f32.mrf.mxu0
        %v481 = vadd.f32 0.0, %v480
        %482 = vmatmul.bf16.gmra.mxu0 %v432
        %v483 = vpop.f32.mrf.mxu0
        %v484 = vadd.f32 0.0, %v483
        %v485 = vpop.f32.mrf.mxu0
        %v486 = vadd.f32 0.0, %v485
        %487 = vmatmul.bf16.gmra.mxu0 %v435
        %v488 = vpop.f32.mrf.mxu0
        %v489 = vadd.f32 0.0, %v488
        %v490 = vpop.f32.mrf.mxu0
        %v491 = vadd.f32 0.0, %v490
        %492 = vdwg.mxu0
        %493 = vmatpush.bf16.msra.mxu0 0
        %494 = vmatpush.bf16.msra.mxu0 0
        %495 = vmatpush.bf16.msra.mxu0 0
        %496 = vmatpush.bf16.msra.mxu0 0
        %497 = vmatpush.bf16.msra.mxu0 0
        %498 = vmatpush.bf16.msra.mxu0 0
        %499 = vmatpush.bf16.msra.mxu0 0
        %500 = vmatpush.bf16.msra.mxu0 %v442
        %501 = vmatmul.bf16.gmra.mxu0 %v414
        %v502 = vpop.f32.mrf.mxu0
        %v503 = vadd.f32 0.0, %v502
        %v504 = vpop.f32.mrf.mxu0
        %v505 = vadd.f32 0.0, %v504
        %506 = vmatmul.bf16.gmra.mxu0 %v417
        %v507 = vpop.f32.mrf.mxu0
        %v508 = vadd.f32 0.0, %v507
        %v509 = vpop.f32.mrf.mxu0
        %v510 = vadd.f32 0.0, %v509
        %511 = vmatmul.bf16.gmra.mxu0 %v420
        %v512 = vpop.f32.mrf.mxu0
        %v513 = vadd.f32 0.0, %v512
        %v514 = vpop.f32.mrf.mxu0
        %v515 = vadd.f32 0.0, %v514
        %516 = vmatmul.bf16.gmra.mxu0 %v423
        %v517 = vpop.f32.mrf.mxu0
        %v518 = vadd.f32 0.0, %v517
        %v519 = vpop.f32.mrf.mxu0
        %v520 = vadd.f32 0.0, %v519
        %521 = vmatmul.bf16.gmra.mxu0 %v426
        %v522 = vpop.f32.mrf.mxu0
        %v523 = vadd.f32 0.0, %v522
        %v524 = vpop.f32.mrf.mxu0
        %v525 = vadd.f32 0.0, %v524
        %526 = vmatmul.bf16.gmra.mxu0 %v429
        %v527 = vpop.f32.mrf.mxu0
        %v528 = vadd.f32 0.0, %v527
        %v529 = vpop.f32.mrf.mxu0
        %v530 = vadd.f32 0.0, %v529
        %531 = vmatmul.bf16.gmra.mxu0 %v432
        %v532 = vpop.f32.mrf.mxu0
        %v533 = vadd.f32 0.0, %v532
        %v534 = vpop.f32.mrf.mxu0
        %v535 = vadd.f32 0.0, %v534
        %536 = vmatmul.bf16.gmra.mxu0 %v435
        %v537 = vpop.f32.mrf.mxu0
        %v538 = vadd.f32 0.0, %v537
        %v539 = vpop.f32.mrf.mxu0
        %v540 = vadd.f32 0.0, %v539
        %541 = vdwg.mxu0
        %v558 = vunpack.c.l.b16 %v321
        %v559 = vunpack.c.l.b16 %v322
        %v560 = vunpack.c.l.b16 %v323
        %v561 = vunpack.c.l.b16 %v324
        %v562 = vunpack.c.l.b16 %v325
        %v563 = vunpack.c.l.b16 %v326
        %v564 = vunpack.c.l.b16 %v327
        %v565 = vunpack.c.l.b16 %v328
        %v566 = vunpack.c.l.b16 %v329
        %v567 = vunpack.c.l.b16 %v330
        %v568 = vunpack.c.l.b16 %v331
        %v569 = vunpack.c.l.b16 %v332
        %v570 = vunpack.c.l.b16 %v333
        %v571 = vunpack.c.l.b16 %v334
        %v572 = vunpack.c.l.b16 %v335
        %v573 = vunpack.c.l.b16 %v336
        %v574 = vpack.c.b16 %v559, %v558
        %v575 = vpack.c.b16 %v561, %v560
        %v576 = vpack.c.b16 %v563, %v562
        %v577 = vpack.c.b16 %v565, %v564
        %v578 = vpack.c.b16 %v567, %v566
        %v579 = vpack.c.b16 %v569, %v568
        %v580 = vpack.c.b16 %v571, %v570
        %v581 = vpack.c.b16 %v573, %v572
        %v584 = vunpack.c.l.b16 %v337
        %v585 = vunpack.c.h.b16 %v337
        %v586 = vunpack.c.l.b16 %v338
        %v587 = vunpack.c.h.b16 %v338
        %v588 = vpack.c.b16 %v586, %v584
        %v589 = vpack.c.b16 %v587, %v585
        %v591 = vsel %vm412, %v574, 0
        %v594 = vsel %vm412, %v575, 0
        %v597 = vsel %vm412, %v576, 0
        %v600 = vsel %vm412, %v577, 0
        %v603 = vsel %vm412, %v578, 0
        %v606 = vsel %vm412, %v579, 0
        %v609 = vsel %vm412, %v580, 0
        %v612 = vsel %vm412, %v581, 0
        %v615 = vsel %vm437, %v588, 0
        %v618 = vsel %vm437, %v589, 0
        %620 = vmatpush.bf16.msra.mxu0 0
        %621 = vmatpush.bf16.msra.mxu0 0
        %622 = vmatpush.bf16.msra.mxu0 0
        %623 = vmatpush.bf16.msra.mxu0 0
        %624 = vmatpush.bf16.msra.mxu0 0
        %625 = vmatpush.bf16.msra.mxu0 0
        %626 = vmatpush.bf16.msra.mxu0 0
        %627 = vmatpush.bf16.msra.mxu0 %v615
        %628 = vmatmul.bf16.gmra.mxu0 %v591
        %v629 = vpop.f32.mrf.mxu0
        %v630 = vadd.f32 %v454, %v629
        %v631 = vpop.f32.mrf.mxu0
        %v632 = vadd.f32 %v456, %v631
        %633 = vmatmul.bf16.gmra.mxu0 %v594
        %v634 = vpop.f32.mrf.mxu0
        %v635 = vadd.f32 %v459, %v634
        %v636 = vpop.f32.mrf.mxu0
        %v637 = vadd.f32 %v461, %v636
        %638 = vmatmul.bf16.gmra.mxu0 %v597
        %v639 = vpop.f32.mrf.mxu0
        %v640 = vadd.f32 %v464, %v639
        %v641 = vpop.f32.mrf.mxu0
        %v642 = vadd.f32 %v466, %v641
        %643 = vmatmul.bf16.gmra.mxu0 %v600
        %v644 = vpop.f32.mrf.mxu0
        %v645 = vadd.f32 %v469, %v644
        %v646 = vpop.f32.mrf.mxu0
        %v647 = vadd.f32 %v471, %v646
        %648 = vmatmul.bf16.gmra.mxu0 %v603
        %v649 = vpop.f32.mrf.mxu0
        %v650 = vadd.f32 %v474, %v649
        %v651 = vpop.f32.mrf.mxu0
        %v652 = vadd.f32 %v476, %v651
        %653 = vmatmul.bf16.gmra.mxu0 %v606
        %v654 = vpop.f32.mrf.mxu0
        %v655 = vadd.f32 %v479, %v654
        %v656 = vpop.f32.mrf.mxu0
        %v657 = vadd.f32 %v481, %v656
        %658 = vmatmul.bf16.gmra.mxu0 %v609
        %v659 = vpop.f32.mrf.mxu0
        %v660 = vadd.f32 %v484, %v659
        %v661 = vpop.f32.mrf.mxu0
        %v662 = vadd.f32 %v486, %v661
        %663 = vmatmul.bf16.gmra.mxu0 %v612
        %v664 = vpop.f32.mrf.mxu0
        %v665 = vadd.f32 %v489, %v664
        %v666 = vpop.f32.mrf.mxu0
        %v667 = vadd.f32 %v491, %v666
        %668 = vdwg.mxu0
        %669 = vmatpush.bf16.msra.mxu0 0
        %670 = vmatpush.bf16.msra.mxu0 0
        %671 = vmatpush.bf16.msra.mxu0 0
        %672 = vmatpush.bf16.msra.mxu0 0
        %673 = vmatpush.bf16.msra.mxu0 0
        %674 = vmatpush.bf16.msra.mxu0 0
        %675 = vmatpush.bf16.msra.mxu0 0
        %676 = vmatpush.bf16.msra.mxu0 %v618
        %677 = vmatmul.bf16.gmra.mxu0 %v591
        %v678 = vpop.f32.mrf.mxu0
        %v679 = vadd.f32 %v503, %v678
        %v680 = vpop.f32.mrf.mxu0
        %v681 = vadd.f32 %v505, %v680
        %682 = vmatmul.bf16.gmra.mxu0 %v594
        %v683 = vpop.f32.mrf.mxu0
        %v684 = vadd.f32 %v508, %v683
        %v685 = vpop.f32.mrf.mxu0
        %v686 = vadd.f32 %v510, %v685
        %687 = vmatmul.bf16.gmra.mxu0 %v597
        %v688 = vpop.f32.mrf.mxu0
        %v689 = vadd.f32 %v513, %v688
        %v690 = vpop.f32.mrf.mxu0
        %v691 = vadd.f32 %v515, %v690
        %692 = vmatmul.bf16.gmra.mxu0 %v600
        %v693 = vpop.f32.mrf.mxu0
        %v694 = vadd.f32 %v518, %v693
        %v695 = vpop.f32.mrf.mxu0
        %v696 = vadd.f32 %v520, %v695
        %697 = vmatmul.bf16.gmra.mxu0 %v603
        %v698 = vpop.f32.mrf.mxu0
        %v699 = vadd.f32 %v523, %v698
        %v700 = vpop.f32.mrf.mxu0
        %v701 = vadd.f32 %v525, %v700
        %702 = vmatmul.bf16.gmra.mxu0 %v606
        %v703 = vpop.f32.mrf.mxu0
        %v704 = vadd.f32 %v528, %v703
        %v705 = vpop.f32.mrf.mxu0
        %v706 = vadd.f32 %v530, %v705
        %707 = vmatmul.bf16.gmra.mxu0 %v609
        %v708 = vpop.f32.mrf.mxu0
        %v709 = vadd.f32 %v533, %v708
        %v710 = vpop.f32.mrf.mxu0
        %v711 = vadd.f32 %v535, %v710
        %712 = vmatmul.bf16.gmra.mxu0 %v612
        %v713 = vpop.f32.mrf.mxu0
        %v714 = vadd.f32 %v538, %v713
        %v715 = vpop.f32.mrf.mxu0
        %v716 = vadd.f32 %v540, %v715
        %717 = vdwg.mxu0
        %s718 = sadd.s32 %s315, 2
        %s719 = smul.u32 %s718, 16
        %s720 = sshra.s32 %s719, 3
        %s721 = sand.u32 %s719, 7
        %s722 = smul.addr %s720, 4
        %s723 = scalar_lea.vmem %s293, %s722
        %v724 = vld [vmem:[%s723] sm:$0xf]
        %v725 = vld [vmem:[%s723 + $0x4] sm:$0xf]
        %v726 = vld [vmem:[%s723 + $0x8] sm:$0xf]
        %v727 = vld [vmem:[%s723 + $0xc] sm:$0xf]
        %v728 = vld [vmem:[%s723 + $0x10] sm:$0xf]
        %v729 = vld [vmem:[%s723 + $0x14] sm:$0xf]
        %v730 = vld [vmem:[%s723 + $0x18] sm:$0xf]
        %v731 = vld [vmem:[%s723 + $0x1c] sm:$0xf]
        %v732 = vld [vmem:[%s723 + $0x20] sm:$0xf]
        %v733 = vld [vmem:[%s723 + $0x24] sm:$0xf]
        %v734 = vld [vmem:[%s723 + $0x28] sm:$0xf]
        %v735 = vld [vmem:[%s723 + $0x2c] sm:$0xf]
        %v736 = vld [vmem:[%s723 + $0x30] sm:$0xf]
        %v737 = vld [vmem:[%s723 + $0x34] sm:$0xf]
        %v738 = vld [vmem:[%s723 + $0x38] sm:$0xf]
        %v739 = vld [vmem:[%s723 + $0x3c] sm:$0xf]
        %s740 = scalar_lea.vmem %s1, 32
        %v741 = vld [vmem:[%s740] sm:$0xff]
        %v742 = vld [vmem:[%s740 + $0x8] sm:$0x33]
        %v759 = vunpack.c.l.b16 %v724
        %v760 = vunpack.c.l.b16 %v725
        %v761 = vunpack.c.l.b16 %v726
        %v762 = vunpack.c.l.b16 %v727
        %v763 = vunpack.c.l.b16 %v728
        %v764 = vunpack.c.l.b16 %v729
        %v765 = vunpack.c.l.b16 %v730
        %v766 = vunpack.c.l.b16 %v731
        %v767 = vunpack.c.l.b16 %v732
        %v768 = vunpack.c.l.b16 %v733
        %v769 = vunpack.c.l.b16 %v734
        %v770 = vunpack.c.l.b16 %v735
        %v771 = vunpack.c.l.b16 %v736
        %v772 = vunpack.c.l.b16 %v737
        %v773 = vunpack.c.l.b16 %v738
        %v774 = vunpack.c.l.b16 %v739
        %v775 = vpack.c.b16 %v760, %v759
        %v776 = vpack.c.b16 %v762, %v761
        %v777 = vpack.c.b16 %v764, %v763
        %v778 = vpack.c.b16 %v766, %v765
        %v779 = vpack.c.b16 %v768, %v767
        %v780 = vpack.c.b16 %v770, %v769
        %v781 = vpack.c.b16 %v772, %v771
        %v782 = vpack.c.b16 %v774, %v773
        %v785 = vunpack.c.l.b16 %v741
        %v786 = vunpack.c.h.b16 %v741
        %v787 = vunpack.c.l.b16 %v742
        %v788 = vunpack.c.h.b16 %v742
        %v789 = vpack.c.b16 %v787, %v785
        %v790 = vpack.c.b16 %v788, %v786
        %v792 = vsel %vm412, %v775, 0
        %v795 = vsel %vm412, %v776, 0
        %v798 = vsel %vm412, %v777, 0
        %v801 = vsel %vm412, %v778, 0
        %v804 = vsel %vm412, %v779, 0
        %v807 = vsel %vm412, %v780, 0
        %v810 = vsel %vm412, %v781, 0
        %v813 = vsel %vm412, %v782, 0
        %v816 = vsel %vm437, %v789, 0
        %v819 = vsel %vm437, %v790, 0
        %821 = vmatpush.bf16.msra.mxu0 0
        %822 = vmatpush.bf16.msra.mxu0 0
        %823 = vmatpush.bf16.msra.mxu0 0
        %824 = vmatpush.bf16.msra.mxu0 0
        %825 = vmatpush.bf16.msra.mxu0 0
        %826 = vmatpush.bf16.msra.mxu0 0
        %827 = vmatpush.bf16.msra.mxu0 0
        %828 = vmatpush.bf16.msra.mxu0 %v816
        %829 = vmatmul.bf16.gmra.mxu0 %v792
        %v830 = vpop.f32.mrf.mxu0
        %v831 = vadd.f32 0.0, %v830
        %v832 = vpop.f32.mrf.mxu0
        %v833 = vadd.f32 0.0, %v832
        %834 = vmatmul.bf16.gmra.mxu0 %v795
        %v835 = vpop.f32.mrf.mxu0
        %v836 = vadd.f32 0.0, %v835
        %v837 = vpop.f32.mrf.mxu0
        %v838 = vadd.f32 0.0, %v837
        %839 = vmatmul.bf16.gmra.mxu0 %v798
        %v840 = vpop.f32.mrf.mxu0
        %v841 = vadd.f32 0.0, %v840
        %v842 = vpop.f32.mrf.mxu0
        %v843 = vadd.f32 0.0, %v842
        %844 = vmatmul.bf16.gmra.mxu0 %v801
        %v845 = vpop.f32.mrf.mxu0
        %v846 = vadd.f32 0.0, %v845
        %v847 = vpop.f32.mrf.mxu0
        %v848 = vadd.f32 0.0, %v847
        %849 = vmatmul.bf16.gmra.mxu0 %v804
        %v850 = vpop.f32.mrf.mxu0
        %v851 = vadd.f32 0.0, %v850
        %v852 = vpop.f32.mrf.mxu0
        %v853 = vadd.f32 0.0, %v852
        %854 = vmatmul.bf16.gmra.mxu0 %v807
        %v855 = vpop.f32.mrf.mxu0
        %v856 = vadd.f32 0.0, %v855
        %v857 = vpop.f32.mrf.mxu0
        %v858 = vadd.f32 0.0, %v857
        %859 = vmatmul.bf16.gmra.mxu0 %v810
        %v860 = vpop.f32.mrf.mxu0
        %v861 = vadd.f32 0.0, %v860
        %v862 = vpop.f32.mrf.mxu0
        %v863 = vadd.f32 0.0, %v862
        %864 = vmatmul.bf16.gmra.mxu0 %v813
        %v865 = vpop.f32.mrf.mxu0
        %v866 = vadd.f32 0.0, %v865
        %v867 = vpop.f32.mrf.mxu0
        %v868 = vadd.f32 0.0, %v867
        %869 = vdwg.mxu0
        %870 = vmatpush.bf16.msra.mxu0 0
        %871 = vmatpush.bf16.msra.mxu0 0
        %872 = vmatpush.bf16.msra.mxu0 0
        %873 = vmatpush.bf16.msra.mxu0 0
        %874 = vmatpush.bf16.msra.mxu0 0
        %875 = vmatpush.bf16.msra.mxu0 0
        %876 = vmatpush.bf16.msra.mxu0 0
        %877 = vmatpush.bf16.msra.mxu0 %v819
        %878 = vmatmul.bf16.gmra.mxu0 %v792
        %v879 = vpop.f32.mrf.mxu0
        %v880 = vadd.f32 0.0, %v879
        %v881 = vpop.f32.mrf.mxu0
        %v882 = vadd.f32 0.0, %v881
        %883 = vmatmul.bf16.gmra.mxu0 %v795
        %v884 = vpop.f32.mrf.mxu0
        %v885 = vadd.f32 0.0, %v884
        %v886 = vpop.f32.mrf.mxu0
        %v887 = vadd.f32 0.0, %v886
        %888 = vmatmul.bf16.gmra.mxu0 %v798
        %v889 = vpop.f32.mrf.mxu0
        %v890 = vadd.f32 0.0, %v889
        %v891 = vpop.f32.mrf.mxu0
        %v892 = vadd.f32 0.0, %v891
        %893 = vmatmul.bf16.gmra.mxu0 %v801
        %v894 = vpop.f32.mrf.mxu0
        %v895 = vadd.f32 0.0, %v894
        %v896 = vpop.f32.mrf.mxu0
        %v897 = vadd.f32 0.0, %v896
        %898 = vmatmul.bf16.gmra.mxu0 %v804
        %v899 = vpop.f32.mrf.mxu0
        %v900 = vadd.f32 0.0, %v899
        %v901 = vpop.f32.mrf.mxu0
        %v902 = vadd.f32 0.0, %v901
        %903 = vmatmul.bf16.gmra.mxu0 %v807
        %v904 = vpop.f32.mrf.mxu0
        %v905 = vadd.f32 0.0, %v904
        %v906 = vpop.f32.mrf.mxu0
        %v907 = vadd.f32 0.0, %v906
        %908 = vmatmul.bf16.gmra.mxu0 %v810
        %v909 = vpop.f32.mrf.mxu0
        %v910 = vadd.f32 0.0, %v909
        %v911 = vpop.f32.mrf.mxu0
        %v912 = vadd.f32 0.0, %v911
        %913 = vmatmul.bf16.gmra.mxu0 %v813
        %v914 = vpop.f32.mrf.mxu0
        %v915 = vadd.f32 0.0, %v914
        %v916 = vpop.f32.mrf.mxu0
        %v917 = vadd.f32 0.0, %v916
        %918 = vdwg.mxu0
        %v919 = vadd.f32 %v630, %v831
        %v920 = vadd.f32 %v679, %v880
        %v921 = vadd.f32 %v632, %v833
        %v922 = vadd.f32 %v681, %v882
        %v923 = vadd.f32 %v635, %v836
        %v924 = vadd.f32 %v684, %v885
        %v925 = vadd.f32 %v637, %v838
        %v926 = vadd.f32 %v686, %v887
        %v927 = vadd.f32 %v640, %v841
        %v928 = vadd.f32 %v689, %v890
        %v929 = vadd.f32 %v642, %v843
        %v930 = vadd.f32 %v691, %v892
        %v931 = vadd.f32 %v645, %v846
        %v932 = vadd.f32 %v694, %v895
        %v933 = vadd.f32 %v647, %v848
        %v934 = vadd.f32 %v696, %v897
        %v935 = vadd.f32 %v650, %v851
        %v936 = vadd.f32 %v699, %v900
        %v937 = vadd.f32 %v652, %v853
        %v938 = vadd.f32 %v701, %v902
        %v939 = vadd.f32 %v655, %v856
        %v940 = vadd.f32 %v704, %v905
        %v941 = vadd.f32 %v657, %v858
        %v942 = vadd.f32 %v706, %v907
        %v943 = vadd.f32 %v660, %v861
        %v944 = vadd.f32 %v709, %v910
        %v945 = vadd.f32 %v662, %v863
        %v946 = vadd.f32 %v711, %v912
        %v947 = vadd.f32 %v665, %v866
        %v948 = vadd.f32 %v714, %v915
        %v949 = vadd.f32 %v667, %v868
        %v950 = vadd.f32 %v716, %v917
        %v951 = vld [vmem:[#allocation2] sm:$0x3]
        %v953 = vperm.slane %v951, 0
        %v954 = vperm.slane %v951, 1
        %v957 = vadd.f32 %v919, %v953
        %v958 = vadd.f32 %v920, %v954
        %v959 = vadd.f32 %v921, %v953
        %v960 = vadd.f32 %v922, %v954
        %v961 = vadd.f32 %v923, %v953
        %v962 = vadd.f32 %v924, %v954
        %v963 = vadd.f32 %v925, %v953
        %v964 = vadd.f32 %v926, %v954
        %v965 = vadd.f32 %v927, %v953
        %v966 = vadd.f32 %v928, %v954
        %v967 = vadd.f32 %v929, %v953
        %v968 = vadd.f32 %v930, %v954
        %v969 = vadd.f32 %v931, %v953
        %v970 = vadd.f32 %v932, %v954
        %v971 = vadd.f32 %v933, %v953
        %v972 = vadd.f32 %v934, %v954
        %v973 = vadd.f32 %v935, %v953
        %v974 = vadd.f32 %v936, %v954
        %v975 = vadd.f32 %v937, %v953
        %v976 = vadd.f32 %v938, %v954
        %v977 = vadd.f32 %v939, %v953
        %v978 = vadd.f32 %v940, %v954
        %v979 = vadd.f32 %v941, %v953
        %v980 = vadd.f32 %v942, %v954
        %v981 = vadd.f32 %v943, %v953
        %v982 = vadd.f32 %v944, %v954
        %v983 = vadd.f32 %v945, %v953
        %v984 = vadd.f32 %v946, %v954
        %v985 = vadd.f32 %v947, %v953
        %v986 = vadd.f32 %v948, %v954
        %v987 = vadd.f32 %v949, %v953
        %v988 = vadd.f32 %v950, %v954
        %v989 = vmax.f32 %v957, 0.0
        %v990 = vmax.f32 %v958, 0.0
        %v991 = vmax.f32 %v959, 0.0
        %v992 = vmax.f32 %v960, 0.0
        %v993 = vmax.f32 %v961, 0.0
        %v994 = vmax.f32 %v962, 0.0
        %v995 = vmax.f32 %v963, 0.0
        %v996 = vmax.f32 %v964, 0.0
        %v997 = vmax.f32 %v965, 0.0
        %v998 = vmax.f32 %v966, 0.0
        %v999 = vmax.f32 %v967, 0.0
        %v1000 = vmax.f32 %v968, 0.0
        %v1001 = vmax.f32 %v969, 0.0
        %v1002 = vmax.f32 %v970, 0.0
        %v1003 = vmax.f32 %v971, 0.0
        %v1004 = vmax.f32 %v972, 0.0
        %v1005 = vmax.f32 %v973, 0.0
        %v1006 = vmax.f32 %v974, 0.0
        %v1007 = vmax.f32 %v975, 0.0
        %v1008 = vmax.f32 %v976, 0.0
        %v1009 = vmax.f32 %v977, 0.0
        %v1010 = vmax.f32 %v978, 0.0
        %v1011 = vmax.f32 %v979, 0.0
        %v1012 = vmax.f32 %v980, 0.0
        %v1013 = vmax.f32 %v981, 0.0
        %v1014 = vmax.f32 %v982, 0.0
        %v1015 = vmax.f32 %v983, 0.0
        %v1016 = vmax.f32 %v984, 0.0
        %v1017 = vmax.f32 %v985, 0.0
        %v1018 = vmax.f32 %v986, 0.0
        %v1019 = vmax.f32 %v987, 0.0
        %v1020 = vmax.f32 %v988, 0.0
        %v1021 = vpack.c.bf16 %v991, %v989
        %v1022 = vpack.c.bf16 %v992, %v990
        %v1023 = vpack.c.bf16 %v995, %v993
        %v1024 = vpack.c.bf16 %v996, %v994
        %v1025 = vpack.c.bf16 %v999, %v997
        %v1026 = vpack.c.bf16 %v1000, %v998
        %v1027 = vpack.c.bf16 %v1003, %v1001
        %v1028 = vpack.c.bf16 %v1004, %v1002
        %v1029 = vpack.c.bf16 %v1007, %v1005
        %v1030 = vpack.c.bf16 %v1008, %v1006
        %v1031 = vpack.c.bf16 %v1011, %v1009
        %v1032 = vpack.c.bf16 %v1012, %v1010
        %v1033 = vpack.c.bf16 %v1015, %v1013
        %v1034 = vpack.c.bf16 %v1016, %v1014
        %v1035 = vpack.c.bf16 %v1019, %v1017
        %v1036 = vpack.c.bf16 %v1020, %v1018
        %v1037 = vld [vmem:[%s3] sm:$0xf]
        %v1038 = vld [vmem:[%s3 + $0x4] sm:$0xf]
        %v1039 = vld [vmem:[%s3 + $0x8] sm:$0xf]
        %v1040 = vld [vmem:[%s3 + $0xc] sm:$0xf]
        %v1041 = vld [vmem:[%s3 + $0x10] sm:$0xf]
        %v1042 = vld [vmem:[%s3 + $0x14] sm:$0xf]
        %v1043 = vld [vmem:[%s3 + $0x18] sm:$0xf]
        %v1044 = vld [vmem:[%s3 + $0x1c] sm:$0xf]
        %v1045 = vld [vmem:[%s3 + $0x20] sm:$0xf]
        %v1046 = vld [vmem:[%s3 + $0x24] sm:$0xf]
        %v1047 = vld [vmem:[%s3 + $0x28] sm:$0xf]
        %v1048 = vld [vmem:[%s3 + $0x2c] sm:$0xf]
        %v1049 = vld [vmem:[%s3 + $0x30] sm:$0xf]
        %v1050 = vld [vmem:[%s3 + $0x34] sm:$0xf]
        %v1051 = vld [vmem:[%s3 + $0x38] sm:$0xf]
        %v1052 = vld [vmem:[%s3 + $0x3c] sm:$0xf]
        %v1053 = vld [vmem:[%s3 + $0x40] sm:$0xf]
        %v1054 = vld [vmem:[%s3 + $0x44] sm:$0xf]
        %v1055 = vld [vmem:[%s3 + $0x48] sm:$0xf]
        %v1056 = vld [vmem:[%s3 + $0x4c] sm:$0xf]
        %v1057 = vld [vmem:[%s3 + $0x50] sm:$0xf]
        %v1058 = vld [vmem:[%s3 + $0x54] sm:$0xf]
        %v1059 = vld [vmem:[%s3 + $0x58] sm:$0xf]
        %v1060 = vld [vmem:[%s3 + $0x5c] sm:$0xf]
        %v1061 = vld [vmem:[%s3 + $0x60] sm:$0xf]
        %v1062 = vld [vmem:[%s3 + $0x64] sm:$0xf]
        %v1063 = vld [vmem:[%s3 + $0x68] sm:$0xf]
        %v1064 = vld [vmem:[%s3 + $0x6c] sm:$0xf]
        %v1065 = vld [vmem:[%s3 + $0x70] sm:$0xf]
        %v1066 = vld [vmem:[%s3 + $0x74] sm:$0xf]
        %v1067 = vld [vmem:[%s3 + $0x78] sm:$0xf]
        %v1068 = vld [vmem:[%s3 + $0x7c] sm:$0xf]
        %v1069 = vld [vmem:[%s4] sm:$0x1]
        %v1071 = vperm.slane %v1069, 0
        %v1105 = vunpack.c.l.b16 %v1037
        %v1106 = vunpack.c.l.b16 %v1038
        %v1107 = vunpack.c.l.b16 %v1039
        %v1108 = vunpack.c.l.b16 %v1040
        %v1109 = vunpack.c.l.b16 %v1041
        %v1110 = vunpack.c.l.b16 %v1042
        %v1111 = vunpack.c.l.b16 %v1043
        %v1112 = vunpack.c.l.b16 %v1044
        %v1113 = vunpack.c.l.b16 %v1045
        %v1114 = vunpack.c.l.b16 %v1046
        %v1115 = vunpack.c.l.b16 %v1047
        %v1116 = vunpack.c.l.b16 %v1048
        %v1117 = vunpack.c.l.b16 %v1049
        %v1118 = vunpack.c.l.b16 %v1050
        %v1119 = vunpack.c.l.b16 %v1051
        %v1120 = vunpack.c.l.b16 %v1052
        %v1121 = vunpack.c.l.b16 %v1053
        %v1122 = vunpack.c.l.b16 %v1054
        %v1123 = vunpack.c.l.b16 %v1055
        %v1124 = vunpack.c.l.b16 %v1056
        %v1125 = vunpack.c.l.b16 %v1057
        %v1126 = vunpack.c.l.b16 %v1058
        %v1127 = vunpack.c.l.b16 %v1059
        %v1128 = vunpack.c.l.b16 %v1060
        %v1129 = vunpack.c.l.b16 %v1061
        %v1130 = vunpack.c.l.b16 %v1062
        %v1131 = vunpack.c.l.b16 %v1063
        %v1132 = vunpack.c.l.b16 %v1064
        %v1133 = vunpack.c.l.b16 %v1065
        %v1134 = vunpack.c.l.b16 %v1066
        %v1135 = vunpack.c.l.b16 %v1067
        %v1136 = vunpack.c.l.b16 %v1068
        %v1137 = vpack.c.b16 %v1106, %v1105
        %v1138 = vpack.c.b16 %v1108, %v1107
        %v1139 = vpack.c.b16 %v1110, %v1109
        %v1140 = vpack.c.b16 %v1112, %v1111
        %v1141 = vpack.c.b16 %v1114, %v1113
        %v1142 = vpack.c.b16 %v1116, %v1115
        %v1143 = vpack.c.b16 %v1118, %v1117
        %v1144 = vpack.c.b16 %v1120, %v1119
        %v1145 = vpack.c.b16 %v1122, %v1121
        %v1146 = vpack.c.b16 %v1124, %v1123
        %v1147 = vpack.c.b16 %v1126, %v1125
        %v1148 = vpack.c.b16 %v1128, %v1127
        %v1149 = vpack.c.b16 %v1130, %v1129
        %v1150 = vpack.c.b16 %v1132, %v1131
        %v1151 = vpack.c.b16 %v1134, %v1133
        %v1152 = vpack.c.b16 %v1136, %v1135
        %1169 = vmatpush.bf16.msra.mxu0 %v1144
        %1170 = vmatpush.bf16.msra.mxu0 %v1143
        %1171 = vmatpush.bf16.msra.mxu0 %v1142
        %1172 = vmatpush.bf16.msra.mxu0 %v1141
        %1173 = vmatpush.bf16.msra.mxu0 %v1140
        %1174 = vmatpush.bf16.msra.mxu0 %v1139
        %1175 = vmatpush.bf16.msra.mxu0 %v1138
        %1176 = vmatpush.bf16.msra.mxu0 %v1137
        %1177 = vmatmul.bf16.gmra.mxu0 %v1021
        %v1178 = vpop.f32.mrf.mxu0
        %v1179 = vadd.f32 %v1071, %v1178
        %v1180 = vpop.f32.mrf.mxu0
        %v1181 = vadd.f32 %v1071, %v1180
        %1182 = vmatmul.bf16.gmra.mxu0 %v1023
        %v1183 = vpop.f32.mrf.mxu0
        %v1184 = vadd.f32 %v1071, %v1183
        %v1185 = vpop.f32.mrf.mxu0
        %v1186 = vadd.f32 %v1071, %v1185
        %1187 = vmatmul.bf16.gmra.mxu0 %v1025
        %v1188 = vpop.f32.mrf.mxu0
        %v1189 = vadd.f32 %v1071, %v1188
        %v1190 = vpop.f32.mrf.mxu0
        %v1191 = vadd.f32 %v1071, %v1190
        %1192 = vmatmul.bf16.gmra.mxu0 %v1027
        %v1193 = vpop.f32.mrf.mxu0
        %v1194 = vadd.f32 %v1071, %v1193
        %v1195 = vpop.f32.mrf.mxu0
        %v1196 = vadd.f32 %v1071, %v1195
        %1197 = vmatmul.bf16.gmra.mxu0 %v1029
        %v1198 = vpop.f32.mrf.mxu0
        %v1199 = vadd.f32 %v1071, %v1198
        %v1200 = vpop.f32.mrf.mxu0
        %v1201 = vadd.f32 %v1071, %v1200
        %1202 = vmatmul.bf16.gmra.mxu0 %v1031
        %v1203 = vpop.f32.mrf.mxu0
        %v1204 = vadd.f32 %v1071, %v1203
        %v1205 = vpop.f32.mrf.mxu0
        %v1206 = vadd.f32 %v1071, %v1205
        %1207 = vmatmul.bf16.gmra.mxu0 %v1033
        %v1208 = vpop.f32.mrf.mxu0
        %v1209 = vadd.f32 %v1071, %v1208
        %v1210 = vpop.f32.mrf.mxu0
        %v1211 = vadd.f32 %v1071, %v1210
        %1212 = vmatmul.bf16.gmra.mxu0 %v1035
        %v1213 = vpop.f32.mrf.mxu0
        %v1214 = vadd.f32 %v1071, %v1213
        %v1215 = vpop.f32.mrf.mxu0
        %v1216 = vadd.f32 %v1071, %v1215
        %1217 = vdwg.mxu0
        %1218 = vmatpush.bf16.msra.mxu0 %v1152
        %1219 = vmatpush.bf16.msra.mxu0 %v1151
        %1220 = vmatpush.bf16.msra.mxu0 %v1150
        %1221 = vmatpush.bf16.msra.mxu0 %v1149
        %1222 = vmatpush.bf16.msra.mxu0 %v1148
        %1223 = vmatpush.bf16.msra.mxu0 %v1147
        %1224 = vmatpush.bf16.msra.mxu0 %v1146
        %1225 = vmatpush.bf16.msra.mxu0 %v1145
        %1226 = vmatmul.bf16.gmra.mxu0 %v1022
        %v1227 = vpop.f32.mrf.mxu0
        %v1228 = vadd.f32 %v1179, %v1227
        %v1229 = vpop.f32.mrf.mxu0
        %v1230 = vadd.f32 %v1181, %v1229
        %1231 = vmatmul.bf16.gmra.mxu0 %v1024
        %v1232 = vpop.f32.mrf.mxu0
        %v1233 = vadd.f32 %v1184, %v1232
        %v1234 = vpop.f32.mrf.mxu0
        %v1235 = vadd.f32 %v1186, %v1234
        %1236 = vmatmul.bf16.gmra.mxu0 %v1026
        %v1237 = vpop.f32.mrf.mxu0
        %v1238 = vadd.f32 %v1189, %v1237
        %v1239 = vpop.f32.mrf.mxu0
        %v1240 = vadd.f32 %v1191, %v1239
        %1241 = vmatmul.bf16.gmra.mxu0 %v1028
        %v1242 = vpop.f32.mrf.mxu0
        %v1243 = vadd.f32 %v1194, %v1242
        %v1244 = vpop.f32.mrf.mxu0
        %v1245 = vadd.f32 %v1196, %v1244
        %1246 = vmatmul.bf16.gmra.mxu0 %v1030
        %v1247 = vpop.f32.mrf.mxu0
        %v1248 = vadd.f32 %v1199, %v1247
        %v1249 = vpop.f32.mrf.mxu0
        %v1250 = vadd.f32 %v1201, %v1249
        %1251 = vmatmul.bf16.gmra.mxu0 %v1032
        %v1252 = vpop.f32.mrf.mxu0
        %v1253 = vadd.f32 %v1204, %v1252
        %v1254 = vpop.f32.mrf.mxu0
        %v1255 = vadd.f32 %v1206, %v1254
        %1256 = vmatmul.bf16.gmra.mxu0 %v1034
        %v1257 = vpop.f32.mrf.mxu0
        %v1258 = vadd.f32 %v1209, %v1257
        %v1259 = vpop.f32.mrf.mxu0
        %v1260 = vadd.f32 %v1211, %v1259
        %1261 = vmatmul.bf16.gmra.mxu0 %v1036
        %v1262 = vpop.f32.mrf.mxu0
        %v1263 = vadd.f32 %v1214, %v1262
        %v1264 = vpop.f32.mrf.mxu0
        %v1265 = vadd.f32 %v1216, %v1264
        %1266 = vdwg.mxu0
        %1267 = vmax.xlane.f32.xlu0 %v1228
        %v1268 = vpop.xlane.xlu0 %1267
        %1269 = vmax.xlane.f32.xlu0 %v1230
        %v1270 = vpop.xlane.xlu0 %1269
        %1271 = vmax.xlane.f32.xlu0 %v1233
        %v1272 = vpop.xlane.xlu0 %1271
        %1273 = vmax.xlane.f32.xlu0 %v1235
        %v1274 = vpop.xlane.xlu0 %1273
        %1275 = vmax.xlane.f32.xlu0 %v1238
        %v1276 = vpop.xlane.xlu0 %1275
        %1277 = vmax.xlane.f32.xlu0 %v1240
        %v1278 = vpop.xlane.xlu0 %1277
        %1279 = vmax.xlane.f32.xlu0 %v1243
        %v1280 = vpop.xlane.xlu0 %1279
        %1281 = vmax.xlane.f32.xlu0 %v1245
        %v1282 = vpop.xlane.xlu0 %1281
        %1283 = vmax.xlane.f32.xlu0 %v1248
        %v1284 = vpop.xlane.xlu0 %1283
        %1285 = vmax.xlane.f32.xlu0 %v1250
        %v1286 = vpop.xlane.xlu0 %1285
        %1287 = vmax.xlane.f32.xlu0 %v1253
        %v1288 = vpop.xlane.xlu0 %1287
        %1289 = vmax.xlane.f32.xlu0 %v1255
        %v1290 = vpop.xlane.xlu0 %1289
        %1291 = vmax.xlane.f32.xlu0 %v1258
        %v1292 = vpop.xlane.xlu0 %1291
        %1293 = vmax.xlane.f32.xlu0 %v1260
        %v1294 = vpop.xlane.xlu0 %1293
        %1295 = vmax.xlane.f32.xlu0 %v1263
        %v1296 = vpop.xlane.xlu0 %1295
        %1297 = vmax.xlane.f32.xlu0 %v1265
        %v1298 = vpop.xlane.xlu0 %1297
        %v1299 = vsub.f32 %v1228, %v1268
        %v1300 = vsub.f32 %v1230, %v1270
        %v1301 = vsub.f32 %v1233, %v1272
        %v1302 = vsub.f32 %v1235, %v1274
        %v1303 = vsub.f32 %v1238, %v1276
        %v1304 = vsub.f32 %v1240, %v1278
        %v1305 = vsub.f32 %v1243, %v1280
        %v1306 = vsub.f32 %v1245, %v1282
        %v1307 = vsub.f32 %v1248, %v1284
        %v1308 = vsub.f32 %v1250, %v1286
        %v1309 = vsub.f32 %v1253, %v1288
        %v1310 = vsub.f32 %v1255, %v1290
        %v1311 = vsub.f32 %v1258, %v1292
        %v1312 = vsub.f32 %v1260, %v1294
        %v1313 = vsub.f32 %v1263, %v1296
        %v1314 = vsub.f32 %v1265, %v1298
        %v1315 = vmul.f32 %v1299, 1.442695
        %v1316 = vpow.pop %v1315
        %v1317 = vmul.f32 %v1300, 1.442695
        %v1318 = vpow.pop %v1317
        %v1319 = vmul.f32 %v1301, 1.442695
        %v1320 = vpow.pop %v1319
        %v1321 = vmul.f32 %v1302, 1.442695
        %v1322 = vpow.pop %v1321
        %v1323 = vmul.f32 %v1303, 1.442695
        %v1324 = vpow.pop %v1323
        %v1325 = vmul.f32 %v1304, 1.442695
        %v1326 = vpow.pop %v1325
        %v1327 = vmul.f32 %v1305, 1.442695
        %v1328 = vpow.pop %v1327
        %v1329 = vmul.f32 %v1306, 1.442695
        %v1330 = vpow.pop %v1329
        %v1331 = vmul.f32 %v1307, 1.442695
        %v1332 = vpow.pop %v1331
        %v1333 = vmul.f32 %v1308, 1.442695
        %v1334 = vpow.pop %v1333
        %v1335 = vmul.f32 %v1309, 1.442695
        %v1336 = vpow.pop %v1335
        %v1337 = vmul.f32 %v1310, 1.442695
        %v1338 = vpow.pop %v1337
        %v1339 = vmul.f32 %v1311, 1.442695
        %v1340 = vpow.pop %v1339
        %v1341 = vmul.f32 %v1312, 1.442695
        %v1342 = vpow.pop %v1341
        %v1343 = vmul.f32 %v1313, 1.442695
        %v1344 = vpow.pop %v1343
        %v1345 = vmul.f32 %v1314, 1.442695
        %v1346 = vpow.pop %v1345
        %1347 = vadd.xlane.f32.xlu0 %v1316
        %v1348 = vpop.xlane.xlu0 %1347
        %1349 = vadd.xlane.f32.xlu0 %v1318
        %v1350 = vpop.xlane.xlu0 %1349
        %1351 = vadd.xlane.f32.xlu0 %v1320
        %v1352 = vpop.xlane.xlu0 %1351
        %1353 = vadd.xlane.f32.xlu0 %v1322
        %v1354 = vpop.xlane.xlu0 %1353
        %1355 = vadd.xlane.f32.xlu0 %v1324
        %v1356 = vpop.xlane.xlu0 %1355
        %1357 = vadd.xlane.f32.xlu0 %v1326
        %v1358 = vpop.xlane.xlu0 %1357
        %1359 = vadd.xlane.f32.xlu0 %v1328
        %v1360 = vpop.xlane.xlu0 %1359
        %1361 = vadd.xlane.f32.xlu0 %v1330
        %v1362 = vpop.xlane.xlu0 %1361
        %1363 = vadd.xlane.f32.xlu0 %v1332
        %v1364 = vpop.xlane.xlu0 %1363
        %1365 = vadd.xlane.f32.xlu0 %v1334
        %v1366 = vpop.xlane.xlu0 %1365
        %1367 = vadd.xlane.f32.xlu0 %v1336
        %v1368 = vpop.xlane.xlu0 %1367
        %1369 = vadd.xlane.f32.xlu0 %v1338
        %v1370 = vpop.xlane.xlu0 %1369
        %1371 = vadd.xlane.f32.xlu0 %v1340
        %v1372 = vpop.xlane.xlu0 %1371
        %1373 = vadd.xlane.f32.xlu0 %v1342
        %v1374 = vpop.xlane.xlu0 %1373
        %1375 = vadd.xlane.f32.xlu0 %v1344
        %v1376 = vpop.xlane.xlu0 %1375
        %1377 = vadd.xlane.f32.xlu0 %v1346
        %v1378 = vpop.xlane.xlu0 %1377
        %v1379 = vrcp.pop %v1348
        %v1380 = vrcp.pop %v1350
        %v1381 = vrcp.pop %v1352
        %v1382 = vrcp.pop %v1354
        %v1383 = vrcp.pop %v1356
        %v1384 = vrcp.pop %v1358
        %v1385 = vrcp.pop %v1360
        %v1386 = vrcp.pop %v1362
        %v1387 = vrcp.pop %v1364
        %v1388 = vrcp.pop %v1366
        %v1389 = vrcp.pop %v1368
        %v1390 = vrcp.pop %v1370
        %v1391 = vrcp.pop %v1372
        %v1392 = vrcp.pop %v1374
        %v1393 = vrcp.pop %v1376
        %v1394 = vrcp.pop %v1378
        %1395 = vst [vmem:[%s302] sm:$0xff] %v1228
        %1396 = vst [vmem:[%s302 + $0x8] sm:$0xff] %v1230
        %1397 = vst [vmem:[%s302 + $0x10] sm:$0xff] %v1233
        %1398 = vst [vmem:[%s302 + $0x18] sm:$0xff] %v1235
        %1399 = vst [vmem:[%s302 + $0x20] sm:$0xff] %v1238
        %1400 = vst [vmem:[%s302 + $0x28] sm:$0xff] %v1240
        %1401 = vst [vmem:[%s302 + $0x30] sm:$0xff] %v1243
        %1402 = vst [vmem:[%s302 + $0x38] sm:$0xff] %v1245
        %1403 = vst [vmem:[%s302 + $0x40] sm:$0xff] %v1248
        %1404 = vst [vmem:[%s302 + $0x48] sm:$0xff] %v1250
        %1405 = vst [vmem:[%s302 + $0x50] sm:$0xff] %v1253
        %1406 = vst [vmem:[%s302 + $0x58] sm:$0xff] %v1255
        %1407 = vst [vmem:[%s302 + $0x60] sm:$0xff] %v1258
        %1408 = vst [vmem:[%s302 + $0x68] sm:$0xff] %v1260
        %1409 = vst [vmem:[%s302 + $0x70] sm:$0xff] %v1263
        %1410 = vst [vmem:[%s302 + $0x78] sm:$0xff] %v1265
        %v1411 = vmul.f32 %v1316, %v1379
        %v1412 = vmul.f32 %v1318, %v1380
        %v1413 = vmul.f32 %v1320, %v1381
        %v1414 = vmul.f32 %v1322, %v1382
        %v1415 = vmul.f32 %v1324, %v1383
        %v1416 = vmul.f32 %v1326, %v1384
        %v1417 = vmul.f32 %v1328, %v1385
        %v1418 = vmul.f32 %v1330, %v1386
        %v1419 = vmul.f32 %v1332, %v1387
        %v1420 = vmul.f32 %v1334, %v1388
        %v1421 = vmul.f32 %v1336, %v1389
        %v1422 = vmul.f32 %v1338, %v1390
        %v1423 = vmul.f32 %v1340, %v1391
        %v1424 = vmul.f32 %v1342, %v1392
        %v1425 = vmul.f32 %v1344, %v1393
        %v1426 = vmul.f32 %v1346, %v1394
        %v1427 = vpack.c.bf16 %v1411, %v1411
        %v1428 = vpack.c.bf16 %v1412, %v1412
        %v1429 = vpack.c.bf16 %v1413, %v1413
        %v1430 = vpack.c.bf16 %v1414, %v1414
        %v1431 = vpack.c.bf16 %v1415, %v1415
        %v1432 = vpack.c.bf16 %v1416, %v1416
        %v1433 = vpack.c.bf16 %v1417, %v1417
        %v1434 = vpack.c.bf16 %v1418, %v1418
        %v1435 = vpack.c.bf16 %v1419, %v1419
        %v1436 = vpack.c.bf16 %v1420, %v1420
        %v1437 = vpack.c.bf16 %v1421, %v1421
        %v1438 = vpack.c.bf16 %v1422, %v1422
        %v1439 = vpack.c.bf16 %v1423, %v1423
        %v1440 = vpack.c.bf16 %v1424, %v1424
        %v1441 = vpack.c.bf16 %v1425, %v1425
        %v1442 = vpack.c.bf16 %v1426, %v1426
        %1443 = vst [vmem:[%s312] sm:$0xf] %v1427
        %1444 = vst [vmem:[%s312 + $0x4] sm:$0xf] %v1428
        %1445 = vst [vmem:[%s312 + $0x8] sm:$0xf] %v1429
        %1446 = vst [vmem:[%s312 + $0xc] sm:$0xf] %v1430
        %1447 = vst [vmem:[%s312 + $0x10] sm:$0xf] %v1431
        %1448 = vst [vmem:[%s312 + $0x14] sm:$0xf] %v1432
        %1449 = vst [vmem:[%s312 + $0x18] sm:$0xf] %v1433
        %1450 = vst [vmem:[%s312 + $0x1c] sm:$0xf] %v1434
        %1451 = vst [vmem:[%s312 + $0x20] sm:$0xf] %v1435
        %1452 = vst [vmem:[%s312 + $0x24] sm:$0xf] %v1436
        %1453 = vst [vmem:[%s312 + $0x28] sm:$0xf] %v1437
        %1454 = vst [vmem:[%s312 + $0x2c] sm:$0xf] %v1438
        %1455 = vst [vmem:[%s312 + $0x30] sm:$0xf] %v1439
        %1456 = vst [vmem:[%s312 + $0x34] sm:$0xf] %v1440
        %1457 = vst [vmem:[%s312 + $0x38] sm:$0xf] %v1441
        %1458 = vst [vmem:[%s312 + $0x3c] sm:$0xf] %v1442
        %s1459 = smul.u32 16, %s24
        %p1460 = scmp.lt.s32.totalorder %s23, 1
        %s1461 = scalar_select %p1460, %s23, 1
        %p1462 = scmp.lt.s32.totalorder %s1459, 31
        %s1463 = scalar_select %p1462, %s1459, 31
        %s1464 = smul.addr %s1461, 32
        %s1465 = sadd.s32 %s1463, %s1464
        %s1466 = smul.addr %s1465, 8
        %s1467 = scalar_lea.vmem %s5, %s1466
        %s1468 = smul.u32 16, %s24
        %p1469 = scmp.lt.s32.totalorder %s23, 1
        %s1470 = scalar_select %p1469, %s23, 1
        %p1471 = scmp.lt.s32.totalorder %s1468, 31
        %s1472 = scalar_select %p1471, %s1468, 31
        %s1473 = smul.addr %s1470, 32
        %s1474 = sadd.s32 %s1472, %s1473
        %s1475 = smul.addr %s1474, 4
        %s1476 = scalar_lea.vmem %s6, %s1475
        // Predicated region
        $region45: #{detector_head_forward.1} parent=39 // pred_check
          %p1477 = pneg %p161
        $region46: #{detector_head_forward.1} parent=39 // pred_check_branch
          %1479 = sbr.rel (%p1477) target = $region48
        $region47: #{detector_head_forward.1} parent=39 // pred_region
          %s1480 = smul.u32 16, %s24
        $region48: #{detector_head_forward.1} parent=39 // pred_fallthru
          _
        // Predicated region
        $region49: #{detector_head_forward.1} parent=39 // pred_check
          %p1481 = pneg %p189
        $region50: #{detector_head_forward.1} parent=39 // pred_check_branch
          %1483 = sbr.rel (%p1481) target = $region52
        $region51: #{detector_head_forward.1} parent=39 // pred_region
          %s1484 = smul.u32 16, %s24
        $region52: #{detector_head_forward.1} parent=39 // pred_fallthru
          _
      $region40: #{detector_head_forward.1} parent=5 // pred_fallthru
        _
      %p1485 = scmp.le.s32.totalorder 2, %s14
      // Predicated region
      $region53: #{detector_head_forward.1} parent=5 // pred_check
        %p1486 = pneg %p1485
      $region54: #{detector_head_forward.1} parent=5 // pred_check_branch
        %1488 = sbr.rel (%p1486) target = $region56
      $region55: #{detector_head_forward.1} parent=5 // pred_region
        %s1489 = ssub.s32 %s14, 2
        // Predicated region
        $region57: #{detector_head_forward.1} parent=55 // pred_check
          %p1490 = pneg %p167
        $region58: #{detector_head_forward.1} parent=55 // pred_check_branch
          %1492 = sbr.rel (%p1490) target = $region60
        $region59: #{detector_head_forward.1} parent=55 // pred_region
          %s1493 = smul.u32 16, %s26
          %p1494 = scmp.lt.s32.totalorder %s25, 1
          %s1495 = scalar_select %p1494, %s25, 1
          %p1496 = scmp.lt.s32.totalorder %s1493, 31
          %s1497 = scalar_select %p1496, %s1493, 31
          %s1498 = smul.addr %s1495, 32
          %s1499 = sadd.s32 %s1497, %s1498
          %s1500 = smul.addr %s1499, 8
          %s1501 = scalar_lea.vmem %s5, %s1500
        $region60: #{detector_head_forward.1} parent=55 // pred_fallthru
          _
        // Predicated region
        $region61: #{detector_head_forward.1} parent=55 // pred_check
          %p1502 = pneg %p195
        $region62: #{detector_head_forward.1} parent=55 // pred_check_branch
          %1504 = sbr.rel (%p1502) target = $region64
        $region63: #{detector_head_forward.1} parent=55 // pred_region
          %s1505 = smul.u32 16, %s26
          %p1506 = scmp.lt.s32.totalorder %s25, 1
          %s1507 = scalar_select %p1506, %s25, 1
          %p1508 = scmp.lt.s32.totalorder %s1505, 31
          %s1509 = scalar_select %p1508, %s1505, 31
          %s1510 = smul.addr %s1507, 32
          %s1511 = sadd.s32 %s1509, %s1510
          %s1512 = smul.addr %s1511, 4
          %s1513 = scalar_lea.vmem %s6, %s1512
        $region64: #{detector_head_forward.1} parent=55 // pred_fallthru
          _
      $region56: #{detector_head_forward.1} parent=5 // pred_fallthru
        _
    $region6: #{detector_head_forward.1} parent=1 // loop_footer
      %s18 = sadd.s32 1, %s14
    $region7: #{detector_head_forward.1} parent=1 // loop_footer_branch
      %13 = sbr.rel target = $region3
    $region8: #{detector_head_forward.1} parent=1 // loop_exit
      _
    %1514 = vsyncpa [#allocation3], 1
    %s1515 = scalar_lea.sflag [#allocation3], 1
    %1516 = vsyncpa %s1515, 1

</llo_original>
